<compile_context>
chip_gen: v7x
topology: tpu7x:2x2x1
jax: 0.10.0
libtpu: 0.0.40
codegen_flags: <defaults>
</compile_context>

<pallas_src>
import math
import numpy as np
import jax
import jax.numpy as jnp
from jax.experimental import pallas as pl
from jax.experimental.pallas import tpu as pltpu


# ----------------------------- config (from get_config) -----------------------------
def get_config():
    inv_K_pool = {
        (15, 20): [[0.0556, 0.0, -0.556, 0.0],
                   [0.0, 0.0556, -0.5, 0.0],
                   [0.0, 0.0, 1.0, 0.0],
                   [0.0, 0.0, 0.0, 1.0]],
    }
    proj_15_20 = [[-7.498, -18.4777, -5.1143, 123.7495],
                  [-2.3994, -10.9992, -3.5678, 92.3475],
                  [-1.1997, -5.9984, -1.8765, 63.8457],
                  [0.0, 0.0, 0.0, 1.0]]
    proj_mats = [{(15, 20): proj_15_20} for _ in range(3)]
    return proj_mats, inv_K_pool


# ----------------------------- sizes -----------------------------
N = 1
C_IN = 3
H = 16
W = 16
HW = H * W                   # 256 pixels -> lane-dense axis everywhere
C_IN_PAD = 8                 # pad input channels to a full sublane group
C_FEAT = 32
D_BINS = 8                   # depth hypotheses
NUM_VIEWS = 2                # proj_mats[1:] -> two (identical) source views
DEPTH_VALUES = tuple(float(v) for v in np.linspace(0.5, 10.0, D_BINS))


# ----------------------------- fused Pallas kernel -----------------------------
def fused_kernel(x_ref, w_ref, b_ref, p_ref, o_ref):
    """Fused MVS2D-style depth regression, channels-on-sublanes.

    x_ref: (C_IN_PAD, HW)      transposed padded image (pixels on lanes)
    w_ref: (C_FEAT, C_IN_PAD)  1x1-conv weight (transposed)
    b_ref: (C_FEAT, 1)         1x1-conv bias
    p_ref: (D_BINS, HW, HW)    bf16 constant, view-summed one-hot warp selection
                               P[d, s, p] = sum_v [idx_v[d, p] == s]
    o_ref: (1, HW)             regressed depth per pixel
    """
    x = x_ref[...]                               # (8, 256)  f32
    wT = w_ref[...]                              # (32, 8)   f32
    b = b_ref[...]                               # (32, 1)   f32

    # --- 1x1-conv features on the MXU: (32,8) @ (8,256) -> (32,256) ---
    featT = jax.lax.dot_general(
        wT, x, dimension_numbers=(((1,), (0,)), ((), ())),
        preferred_element_type=jnp.float32)
    featT = jnp.maximum(featT + b, 0.0)          # ReLU; ref features == src features
    feat_bf = featT.astype(jnp.bfloat16)         # MXU-native operand for the warp matmuls

    scale = 1.0 / (float(NUM_VIEWS) * math.sqrt(C_FEAT))  # view-average + 1/sqrt(C)

    # --- plane sweep: one tiny MXU matmul per depth bin, consumed immediately ---
    # warpedT_d[c, p] = sum_s feat[c, s] * P[d, s, p] = sum_v feat[c, idx_v[d, p]]
    score_rows = []
    for d in range(D_BINS):                      # static unroll, per-bin working set ~8 vregs
        warpedT = jax.lax.dot_general(
            feat_bf, p_ref[d],
            dimension_numbers=(((1,), (0,)), ((), ())),
            preferred_element_type=jnp.float32)  # (32, 256) f32
        score_rows.append(
            jnp.sum(featT * warpedT, axis=0, keepdims=True) * scale)  # (1, 256)

    # --- softmax over the D depth hypotheses + expected depth ---
    m = score_rows[0]
    for d in range(1, D_BINS):
        m = jnp.maximum(m, score_rows[d])
    num = jnp.zeros((1, HW), jnp.float32)
    den = jnp.zeros((1, HW), jnp.float32)
    for d in range(D_BINS):
        e = jnp.exp(score_rows[d] - m)           # EUP
        den = den + e
        num = num + e * DEPTH_VALUES[d]          # depth bins baked as scalar constants
    # EUP reciprocal (approx=False if bit-parity with torch.softmax is required)
    o_ref[...] = num * pl.reciprocal(den, approx=True)


# ----------------------------- static warp tables (host / trace time) -----------------------------
def build_warp_indices(inv_k4, proj4, depth_vals, h, w):
    """Nearest-neighbour plane-sweep sampling indices: (D, H*W) int32 (pure numpy)."""
    ys, xs = np.meshgrid(np.arange(h, dtype=np.float32),
                         np.arange(w, dtype=np.float32), indexing="ij")
    pix = np.stack([xs.ravel(), ys.ravel(), np.ones(h * w, np.float32)], axis=0)  # (3, HW)
    cam_rays = inv_k4[:3, :3] @ pix                                               # (3, HW)
    rows = []
    for d in depth_vals:
        pts = cam_rays * d
        pts_h = np.concatenate([pts, np.ones((1, pts.shape[1]), np.float32)], axis=0)
        src = proj4 @ pts_h                                                       # (4, HW)
        z = np.where(np.abs(src[2]) < 1e-6, 1e-6, src[2])
        u = src[0] / z
        v = src[1] / z
        ui = np.clip(np.round(u), 0, w - 1).astype(np.int32)
        vi = np.clip(np.round(v), 0, h - 1).astype(np.int32)
        rows.append(vi * w + ui)
    return np.stack(rows, axis=0)                                                 # (D, HW)


def build_selection_matrix(idx_per_view, hw):
    """P[d, s, p] = sum_v [idx_v[d, p] == s]  (views pre-summed on the host)."""
    sel = np.zeros((D_BINS, hw, hw), np.float32)
    cols = np.arange(hw)
    for idx in idx_per_view:                 # each (D, HW)
        for d in range(D_BINS):
            sel[d, idx[d], cols] += 1.0
    return sel


# ----------------------------- wrapper -----------------------------
@jax.jit
def warp_pose_model_forward(image, w_feat_t, b_feat):
    """Mirrors WarpPoseModel.forward: image -> (H, W) depth map."""
    proj_mats, inv_k_pool = get_config()
    inv_k = np.asarray(inv_k_pool[(15, 20)], dtype=np.float32)
    proj_src = [np.asarray(pm[(15, 20)], dtype=np.float32) for pm in proj_mats[1:]]
    depth_vals = np.asarray(DEPTH_VALUES, dtype=np.float32)

    # Compile-time-constant, view-summed warp selection matrix (bf16: values 0/1/2 exact).
    idx_views = [build_warp_indices(inv_k, p, depth_vals, H, W) for p in proj_src]
    p_table = jnp.asarray(build_selection_matrix(idx_views, HW), dtype=jnp.bfloat16)

    # Image fed channels-on-sublanes: (C_IN_PAD, HW), pixels lane-dense.
    n, c, h, w = image.shape
    x = image.reshape(n * c, h * w)                                   # (3, 256)
    x = jnp.pad(x, ((0, C_IN_PAD - c), (0, 0)))                       # (8, 256)

    depth_flat = pl.pallas_call(
        fused_kernel,
        out_shape=jax.ShapeDtypeStruct((1, HW), jnp.float32),
        grid=(1,),
        in_specs=[
            pl.BlockSpec((C_IN_PAD, HW), lambda i: (0, 0)),
            pl.BlockSpec((C_FEAT, C_IN_PAD), lambda i: (0, 0)),
            pl.BlockSpec((C_FEAT, 1), lambda i: (0, 0)),
            pl.BlockSpec((D_BINS, HW, HW), lambda i: (0, 0, 0)),
        ],
        out_specs=pl.BlockSpec((1, HW), lambda i: (0, 0)),
        compiler_params=pltpu.CompilerParams(
            dimension_semantics=("arbitrary",)),
        cost_estimate=pl.CostEstimate(
            flops=2 * C_FEAT * C_IN_PAD * HW            # 1x1-conv matmul
                  + D_BINS * 2 * C_FEAT * HW * HW       # per-bin warp matmuls
                  + D_BINS * 3 * C_FEAT * HW,           # score mul + sublane reduce
            transcendentals=D_BINS * HW + HW,           # exp + reciprocal
            bytes_accessed=4 * (C_IN_PAD * HW + C_FEAT * C_IN_PAD + C_FEAT + HW)
                           + 2 * D_BINS * HW * HW,      # bf16 P table dominates
        ),
    )(x, w_feat_t, b_feat, p_table)

    # depth_pred[0, 0] in the PyTorch module -> (H, W) map
    return depth_flat.reshape(H, W)


# ----------------------------- main -----------------------------
if __name__ == "__main__":
    key = jax.random.PRNGKey(0)
    k_img, k_w, k_b = jax.random.split(key, 3)

    # deterministic synthetic parameters (1x1-conv feature extractor stand-in)
    w_feat_t = (jax.random.normal(k_w, (C_FEAT, C_IN_PAD), dtype=jnp.float32)
                * (1.0 / math.sqrt(C_IN_PAD)))
    b_feat = jax.random.normal(k_b, (C_FEAT, 1), dtype=jnp.float32) * 0.01

    image = jax.random.normal(k_img, (N, C_IN, H, W), dtype=jnp.float32)

    depth = warp_pose_model_forward(image, w_feat_t, b_feat)
    depth = jax.block_until_ready(depth)

    assert depth.shape == (H, W), depth.shape
    assert bool(jnp.all(jnp.isfinite(depth)))
    print("KERNEL_OK")
</pallas_src>

<mosaic_0001>
module attributes {stable_mosaic.version = 11 : i64} {
  func.func @fused_kernel(%arg0: i32, %arg1: memref<8x256xf32, #tpu.memory_space<vmem>>, %arg2: memref<32x8xf32, #tpu.memory_space<vmem>>, %arg3: memref<32x1xf32, #tpu.memory_space<vmem>>, %arg4: memref<8x256x256xbf16, #tpu.memory_space<vmem>>, %arg5: memref<1x256xf32, #tpu.memory_space<vmem>>) attributes {dimension_semantics = [#tpu.dimension_semantics<arbitrary>], iteration_bounds = array<i64: 1>, scalar_prefetch = 0 : i64, scratch_operands = 0 : i64, tpu.core_type = #tpu.core_type<tc>, window_params = [{pipeline_mode = #tpu.pipeline_mode<synchronous>, transform_indices = @transform_0, window_bounds = array<i64: 8, 256>}, {pipeline_mode = #tpu.pipeline_mode<synchronous>, transform_indices = @transform_1, window_bounds = array<i64: 32, 8>}, {pipeline_mode = #tpu.pipeline_mode<synchronous>, transform_indices = @transform_2, window_bounds = array<i64: 32, 1>}, {pipeline_mode = #tpu.pipeline_mode<synchronous>, transform_indices = @transform_3, window_bounds = array<i64: 8, 256, 256>}, {pipeline_mode = #tpu.pipeline_mode<synchronous>, transform_indices = @transform_4, window_bounds = array<i64: 1, 256>}]} {
    %c0 = arith.constant 0 : index
    %c0_0 = arith.constant 0 : index
    %0 = vector.load %arg1[%c0, %c0_0] : memref<8x256xf32, #tpu.memory_space<vmem>>, vector<8x256xf32>
    %c0_1 = arith.constant 0 : index
    %c0_2 = arith.constant 0 : index
    %1 = vector.load %arg2[%c0_1, %c0_2] : memref<32x8xf32, #tpu.memory_space<vmem>>, vector<32x8xf32>
    %c0_3 = arith.constant 0 : index
    %c0_4 = arith.constant 0 : index
    %2 = vector.load %arg3[%c0_3, %c0_4] : memref<32x1xf32, #tpu.memory_space<vmem>>, vector<32x1xf32>
    %cst = arith.constant dense<0.000000e+00> : vector<32x256xf32>
    %3 = tpu.matmul %1, %0, %cst {dimension_numbers = #tpu.dot_dimension_numbers<[1], [0], [0], [1], [0, 0, 1, 1], [], []>} : vector<32x8xf32>, vector<8x256xf32>, vector<32x256xf32> -> vector<32x256xf32>
    %4 = vector.broadcast %2 : vector<32x1xf32> to vector<32x256xf32>
    %5 = arith.addf %3, %4 : vector<32x256xf32>
    %cst_5 = arith.constant 0.000000e+00 : f32
    %6 = vector.broadcast %cst_5 : f32 to vector<32x256xf32>
    %7 = arith.maximumf %5, %6 : vector<32x256xf32>
    %8 = arith.truncf %7 : vector<32x256xf32> to vector<32x256xbf16>
    %c0_6 = arith.constant 0 : index
    %c0_7 = arith.constant 0 : index
    %c0_8 = arith.constant 0 : index
    %9 = vector.load %arg4[%c0_6, %c0_7, %c0_8] : memref<8x256x256xbf16, #tpu.memory_space<vmem>>, vector<1x256x256xbf16>
    %10 = vector.shape_cast %9 : vector<1x256x256xbf16> to vector<256x256xbf16>
    %cst_9 = arith.constant dense<0.000000e+00> : vector<32x256xf32>
    %11 = tpu.matmul %8, %10, %cst_9 {dimension_numbers = #tpu.dot_dimension_numbers<[1], [0], [0], [1], [0, 0, 1, 1], [], []>} : vector<32x256xbf16>, vector<256x256xbf16>, vector<32x256xf32> -> vector<32x256xf32>
    %12 = arith.mulf %7, %11 : vector<32x256xf32>
    %cst_10 = arith.constant dense<0.000000e+00> : vector<256xf32>
    %13 = vector.multi_reduction <add>, %12, %cst_10 [0] : vector<32x256xf32> to vector<256xf32>
    %14 = vector.shape_cast %13 : vector<256xf32> to vector<1x256xf32>
    %cst_11 = arith.constant 0.0883883461 : f32
    %15 = vector.broadcast %cst_11 : f32 to vector<1x256xf32>
    %16 = arith.mulf %14, %15 : vector<1x256xf32>
    %c1 = arith.constant 1 : index
    %c0_12 = arith.constant 0 : index
    %c0_13 = arith.constant 0 : index
    %17 = vector.load %arg4[%c1, %c0_12, %c0_13] : memref<8x256x256xbf16, #tpu.memory_space<vmem>>, vector<1x256x256xbf16>
    %18 = vector.shape_cast %17 : vector<1x256x256xbf16> to vector<256x256xbf16>
    %cst_14 = arith.constant dense<0.000000e+00> : vector<32x256xf32>
    %19 = tpu.matmul %8, %18, %cst_14 {dimension_numbers = #tpu.dot_dimension_numbers<[1], [0], [0], [1], [0, 0, 1, 1], [], []>} : vector<32x256xbf16>, vector<256x256xbf16>, vector<32x256xf32> -> vector<32x256xf32>
    %20 = arith.mulf %7, %19 : vector<32x256xf32>
    %cst_15 = arith.constant dense<0.000000e+00> : vector<256xf32>
    %21 = vector.multi_reduction <add>, %20, %cst_15 [0] : vector<32x256xf32> to vector<256xf32>
    %22 = vector.shape_cast %21 : vector<256xf32> to vector<1x256xf32>
    %cst_16 = arith.constant 0.0883883461 : f32
    %23 = vector.broadcast %cst_16 : f32 to vector<1x256xf32>
    %24 = arith.mulf %22, %23 : vector<1x256xf32>
    %c2 = arith.constant 2 : index
    %c0_17 = arith.constant 0 : index
    %c0_18 = arith.constant 0 : index
    %25 = vector.load %arg4[%c2, %c0_17, %c0_18] : memref<8x256x256xbf16, #tpu.memory_space<vmem>>, vector<1x256x256xbf16>
    %26 = vector.shape_cast %25 : vector<1x256x256xbf16> to vector<256x256xbf16>
    %cst_19 = arith.constant dense<0.000000e+00> : vector<32x256xf32>
    %27 = tpu.matmul %8, %26, %cst_19 {dimension_numbers = #tpu.dot_dimension_numbers<[1], [0], [0], [1], [0, 0, 1, 1], [], []>} : vector<32x256xbf16>, vector<256x256xbf16>, vector<32x256xf32> -> vector<32x256xf32>
    %28 = arith.mulf %7, %27 : vector<32x256xf32>
    %cst_20 = arith.constant dense<0.000000e+00> : vector<256xf32>
    %29 = vector.multi_reduction <add>, %28, %cst_20 [0] : vector<32x256xf32> to vector<256xf32>
    %30 = vector.shape_cast %29 : vector<256xf32> to vector<1x256xf32>
    %cst_21 = arith.constant 0.0883883461 : f32
    %31 = vector.broadcast %cst_21 : f32 to vector<1x256xf32>
    %32 = arith.mulf %30, %31 : vector<1x256xf32>
    %c3 = arith.constant 3 : index
    %c0_22 = arith.constant 0 : index
    %c0_23 = arith.constant 0 : index
    %33 = vector.load %arg4[%c3, %c0_22, %c0_23] : memref<8x256x256xbf16, #tpu.memory_space<vmem>>, vector<1x256x256xbf16>
    %34 = vector.shape_cast %33 : vector<1x256x256xbf16> to vector<256x256xbf16>
    %cst_24 = arith.constant dense<0.000000e+00> : vector<32x256xf32>
    %35 = tpu.matmul %8, %34, %cst_24 {dimension_numbers = #tpu.dot_dimension_numbers<[1], [0], [0], [1], [0, 0, 1, 1], [], []>} : vector<32x256xbf16>, vector<256x256xbf16>, vector<32x256xf32> -> vector<32x256xf32>
    %36 = arith.mulf %7, %35 : vector<32x256xf32>
    %cst_25 = arith.constant dense<0.000000e+00> : vector<256xf32>
    %37 = vector.multi_reduction <add>, %36, %cst_25 [0] : vector<32x256xf32> to vector<256xf32>
    %38 = vector.shape_cast %37 : vector<256xf32> to vector<1x256xf32>
    %cst_26 = arith.constant 0.0883883461 : f32
    %39 = vector.broadcast %cst_26 : f32 to vector<1x256xf32>
    %40 = arith.mulf %38, %39 : vector<1x256xf32>
    %c4 = arith.constant 4 : index
    %c0_27 = arith.constant 0 : index
    %c0_28 = arith.constant 0 : index
    %41 = vector.load %arg4[%c4, %c0_27, %c0_28] : memref<8x256x256xbf16, #tpu.memory_space<vmem>>, vector<1x256x256xbf16>
    %42 = vector.shape_cast %41 : vector<1x256x256xbf16> to vector<256x256xbf16>
    %cst_29 = arith.constant dense<0.000000e+00> : vector<32x256xf32>
    %43 = tpu.matmul %8, %42, %cst_29 {dimension_numbers = #tpu.dot_dimension_numbers<[1], [0], [0], [1], [0, 0, 1, 1], [], []>} : vector<32x256xbf16>, vector<256x256xbf16>, vector<32x256xf32> -> vector<32x256xf32>
    %44 = arith.mulf %7, %43 : vector<32x256xf32>
    %cst_30 = arith.constant dense<0.000000e+00> : vector<256xf32>
    %45 = vector.multi_reduction <add>, %44, %cst_30 [0] : vector<32x256xf32> to vector<256xf32>
    %46 = vector.shape_cast %45 : vector<256xf32> to vector<1x256xf32>
    %cst_31 = arith.constant 0.0883883461 : f32
    %47 = vector.broadcast %cst_31 : f32 to vector<1x256xf32>
    %48 = arith.mulf %46, %47 : vector<1x256xf32>
    %c5 = arith.constant 5 : index
    %c0_32 = arith.constant 0 : index
    %c0_33 = arith.constant 0 : index
    %49 = vector.load %arg4[%c5, %c0_32, %c0_33] : memref<8x256x256xbf16, #tpu.memory_space<vmem>>, vector<1x256x256xbf16>
    %50 = vector.shape_cast %49 : vector<1x256x256xbf16> to vector<256x256xbf16>
    %cst_34 = arith.constant dense<0.000000e+00> : vector<32x256xf32>
    %51 = tpu.matmul %8, %50, %cst_34 {dimension_numbers = #tpu.dot_dimension_numbers<[1], [0], [0], [1], [0, 0, 1, 1], [], []>} : vector<32x256xbf16>, vector<256x256xbf16>, vector<32x256xf32> -> vector<32x256xf32>
    %52 = arith.mulf %7, %51 : vector<32x256xf32>
    %cst_35 = arith.constant dense<0.000000e+00> : vector<256xf32>
    %53 = vector.multi_reduction <add>, %52, %cst_35 [0] : vector<32x256xf32> to vector<256xf32>
    %54 = vector.shape_cast %53 : vector<256xf32> to vector<1x256xf32>
    %cst_36 = arith.constant 0.0883883461 : f32
    %55 = vector.broadcast %cst_36 : f32 to vector<1x256xf32>
    %56 = arith.mulf %54, %55 : vector<1x256xf32>
    %c6 = arith.constant 6 : index
    %c0_37 = arith.constant 0 : index
    %c0_38 = arith.constant 0 : index
    %57 = vector.load %arg4[%c6, %c0_37, %c0_38] : memref<8x256x256xbf16, #tpu.memory_space<vmem>>, vector<1x256x256xbf16>
    %58 = vector.shape_cast %57 : vector<1x256x256xbf16> to vector<256x256xbf16>
    %cst_39 = arith.constant dense<0.000000e+00> : vector<32x256xf32>
    %59 = tpu.matmul %8, %58, %cst_39 {dimension_numbers = #tpu.dot_dimension_numbers<[1], [0], [0], [1], [0, 0, 1, 1], [], []>} : vector<32x256xbf16>, vector<256x256xbf16>, vector<32x256xf32> -> vector<32x256xf32>
    %60 = arith.mulf %7, %59 : vector<32x256xf32>
    %cst_40 = arith.constant dense<0.000000e+00> : vector<256xf32>
    %61 = vector.multi_reduction <add>, %60, %cst_40 [0] : vector<32x256xf32> to vector<256xf32>
    %62 = vector.shape_cast %61 : vector<256xf32> to vector<1x256xf32>
    %cst_41 = arith.constant 0.0883883461 : f32
    %63 = vector.broadcast %cst_41 : f32 to vector<1x256xf32>
    %64 = arith.mulf %62, %63 : vector<1x256xf32>
    %c7 = arith.constant 7 : index
    %c0_42 = arith.constant 0 : index
    %c0_43 = arith.constant 0 : index
    %65 = vector.load %arg4[%c7, %c0_42, %c0_43] : memref<8x256x256xbf16, #tpu.memory_space<vmem>>, vector<1x256x256xbf16>
    %66 = vector.shape_cast %65 : vector<1x256x256xbf16> to vector<256x256xbf16>
    %cst_44 = arith.constant dense<0.000000e+00> : vector<32x256xf32>
    %67 = tpu.matmul %8, %66, %cst_44 {dimension_numbers = #tpu.dot_dimension_numbers<[1], [0], [0], [1], [0, 0, 1, 1], [], []>} : vector<32x256xbf16>, vector<256x256xbf16>, vector<32x256xf32> -> vector<32x256xf32>
    %68 = arith.mulf %7, %67 : vector<32x256xf32>
    %cst_45 = arith.constant dense<0.000000e+00> : vector<256xf32>
    %69 = vector.multi_reduction <add>, %68, %cst_45 [0] : vector<32x256xf32> to vector<256xf32>
    %70 = vector.shape_cast %69 : vector<256xf32> to vector<1x256xf32>
    %cst_46 = arith.constant 0.0883883461 : f32
    %71 = vector.broadcast %cst_46 : f32 to vector<1x256xf32>
    %72 = arith.mulf %70, %71 : vector<1x256xf32>
    %73 = arith.maximumf %16, %24 : vector<1x256xf32>
    %74 = arith.maximumf %73, %32 : vector<1x256xf32>
    %75 = arith.maximumf %74, %40 : vector<1x256xf32>
    %76 = arith.maximumf %75, %48 : vector<1x256xf32>
    %77 = arith.maximumf %76, %56 : vector<1x256xf32>
    %78 = arith.maximumf %77, %64 : vector<1x256xf32>
    %79 = arith.maximumf %78, %72 : vector<1x256xf32>
    %cst_47 = arith.constant 0.000000e+00 : f32
    %80 = vector.broadcast %cst_47 : f32 to vector<1x256xf32>
    %cst_48 = arith.constant 0.000000e+00 : f32
    %81 = vector.broadcast %cst_48 : f32 to vector<1x256xf32>
    %82 = arith.subf %16, %79 : vector<1x256xf32>
    %83 = math.exp %82 : vector<1x256xf32>
    %84 = arith.addf %81, %83 : vector<1x256xf32>
    %cst_49 = arith.constant 5.000000e-01 : f32
    %85 = vector.broadcast %cst_49 : f32 to vector<1x256xf32>
    %86 = arith.mulf %83, %85 : vector<1x256xf32>
    %87 = arith.addf %80, %86 : vector<1x256xf32>
    %88 = arith.subf %24, %79 : vector<1x256xf32>
    %89 = math.exp %88 : vector<1x256xf32>
    %90 = arith.addf %84, %89 : vector<1x256xf32>
    %cst_50 = arith.constant 1.85714281 : f32
    %91 = vector.broadcast %cst_50 : f32 to vector<1x256xf32>
    %92 = arith.mulf %89, %91 : vector<1x256xf32>
    %93 = arith.addf %87, %92 : vector<1x256xf32>
    %94 = arith.subf %32, %79 : vector<1x256xf32>
    %95 = math.exp %94 : vector<1x256xf32>
    %96 = arith.addf %90, %95 : vector<1x256xf32>
    %cst_51 = arith.constant 3.21428561 : f32
    %97 = vector.broadcast %cst_51 : f32 to vector<1x256xf32>
    %98 = arith.mulf %95, %97 : vector<1x256xf32>
    %99 = arith.addf %93, %98 : vector<1x256xf32>
    %100 = arith.subf %40, %79 : vector<1x256xf32>
    %101 = math.exp %100 : vector<1x256xf32>
    %102 = arith.addf %96, %101 : vector<1x256xf32>
    %cst_52 = arith.constant 4.57142878 : f32
    %103 = vector.broadcast %cst_52 : f32 to vector<1x256xf32>
    %104 = arith.mulf %101, %103 : vector<1x256xf32>
    %105 = arith.addf %99, %104 : vector<1x256xf32>
    %106 = arith.subf %48, %79 : vector<1x256xf32>
    %107 = math.exp %106 : vector<1x256xf32>
    %108 = arith.addf %102, %107 : vector<1x256xf32>
    %cst_53 = arith.constant 5.92857122 : f32
    %109 = vector.broadcast %cst_53 : f32 to vector<1x256xf32>
    %110 = arith.mulf %107, %109 : vector<1x256xf32>
    %111 = arith.addf %105, %110 : vector<1x256xf32>
    %112 = arith.subf %56, %79 : vector<1x256xf32>
    %113 = math.exp %112 : vector<1x256xf32>
    %114 = arith.addf %108, %113 : vector<1x256xf32>
    %cst_54 = arith.constant 7.28571414 : f32
    %115 = vector.broadcast %cst_54 : f32 to vector<1x256xf32>
    %116 = arith.mulf %113, %115 : vector<1x256xf32>
    %117 = arith.addf %111, %116 : vector<1x256xf32>
    %118 = arith.subf %64, %79 : vector<1x256xf32>
    %119 = math.exp %118 : vector<1x256xf32>
    %120 = arith.addf %114, %119 : vector<1x256xf32>
    %cst_55 = arith.constant 8.64285755 : f32
    %121 = vector.broadcast %cst_55 : f32 to vector<1x256xf32>
    %122 = arith.mulf %119, %121 : vector<1x256xf32>
    %123 = arith.addf %117, %122 : vector<1x256xf32>
    %124 = arith.subf %72, %79 : vector<1x256xf32>
    %125 = math.exp %124 : vector<1x256xf32>
    %126 = arith.addf %120, %125 : vector<1x256xf32>
    %cst_56 = arith.constant 1.000000e+01 : f32
    %127 = vector.broadcast %cst_56 : f32 to vector<1x256xf32>
    %128 = arith.mulf %125, %127 : vector<1x256xf32>
    %129 = arith.addf %123, %128 : vector<1x256xf32>
    %130 = tpu.reciprocal %126 {approx = true} : vector<1x256xf32> -> vector<1x256xf32>
    %131 = arith.mulf %129, %130 : vector<1x256xf32>
    %c0_57 = arith.constant 0 : index
    %c0_58 = arith.constant 0 : index
    %132 = vector.load %arg5[%c0_57, %c0_58] : memref<1x256xf32, #tpu.memory_space<vmem>>, vector<1x256xf32>
    tpu.vector_store %arg5[%c0_57, %c0_58], %131 {strides = array<i32>} : memref<1x256xf32, #tpu.memory_space<vmem>>, vector<1x256xf32>,
    return
  }
  func.func @transform_0(%arg0: i32) -> (i32, i32) {
    %c0_i32 = arith.constant 0 : i32
    %c0_i32_0 = arith.constant 0 : i32
    %c0_i32_1 = arith.constant 0 : i32
    return %c0_i32, %c0_i32_0 : i32, i32
  }
  func.func @transform_1(%arg0: i32) -> (i32, i32) {
    %c0_i32 = arith.constant 0 : i32
    %c0_i32_0 = arith.constant 0 : i32
    %c0_i32_1 = arith.constant 0 : i32
    return %c0_i32, %c0_i32_0 : i32, i32
  }
  func.func @transform_2(%arg0: i32) -> (i32, i32) {
    %c0_i32 = arith.constant 0 : i32
    %c0_i32_0 = arith.constant 0 : i32
    %c0_i32_1 = arith.constant 0 : i32
    return %c0_i32, %c0_i32_0 : i32, i32
  }
  func.func @transform_3(%arg0: i32) -> (i32, i32, i32) {
    %c0_i32 = arith.constant 0 : i32
    %c0_i32_0 = arith.constant 0 : i32
    %c0_i32_1 = arith.constant 0 : i32
    %c0_i32_2 = arith.constant 0 : i32
    return %c0_i32, %c0_i32_0, %c0_i32_1 : i32, i32, i32
  }
  func.func @transform_4(%arg0: i32) -> (i32, i32) {
    %c0_i32 = arith.constant 0 : i32
    %c0_i32_0 = arith.constant 0 : i32
    %c0_i32_1 = arith.constant 0 : i32
    return %c0_i32, %c0_i32_0 : i32, i32
  }
}

</mosaic_0001>

<llo_original>
// kernel: warp_pose_model_forward.1
$region0: #{warp_pose_model_forward.1}
  #allocation0 [shape = 'u32[]', space=smem, size = 0x4, offset = 0x4, fixed_abs, tag = 'smem constant byte address 0x4 - core index']
  #allocation1 [shape = 'u32[144,128]{1,0:T(1,128)}', space=vmem, size = 0x12000, scoped, tag = 'internal scratch']
  %s0 = inlined_call_operand.vmem [shape: f32[8,256], index: 0, kind: input, shape index: {}]
  %s1 = inlined_call_operand.vmem [shape: f32[32,8], index: 1, kind: input, shape index: {}]
  %s2 = inlined_call_operand.vmem [shape: f32[32,1], index: 2, kind: input, shape index: {}]
  %s3 = inlined_call_operand.vmem [shape: bf16[8,256,256], index: 3, kind: input, shape index: {}]
  %s4 = inlined_call_operand.vmem [shape: f32[1,256], index: 4, kind: output, shape index: {}]
  %s5 = sld [smem:[#allocation0]]
  $region26: #{warp_pose_model_forward.1} parent=0
    _
  %s7 = ssub.s32 1, %s5
  %s8 = scalar_select 0, %s7, %s5
  // Predicated region
  $region2: #{warp_pose_model_forward.1} parent=0 // pred_check
    _
  $region3: #{warp_pose_model_forward.1} parent=0 // pred_check_branch
    %10 = sbr.rel (0) target = $region5
  $region4: #{warp_pose_model_forward.1} parent=0 // pred_region
    _
  $region5: #{warp_pose_model_forward.1} parent=0 // pred_fallthru
    _
  // Predicated region
  $region6: #{warp_pose_model_forward.1} parent=0 // pred_check
    _
  $region7: #{warp_pose_model_forward.1} parent=0 // pred_check_branch
    %12 = sbr.rel (0) target = $region9
  $region8: #{warp_pose_model_forward.1} parent=0 // pred_region
    _
  $region9: #{warp_pose_model_forward.1} parent=0 // pred_fallthru
    _
  // Predicated region
  $region10: #{warp_pose_model_forward.1} parent=0 // pred_check
    _
  $region11: #{warp_pose_model_forward.1} parent=0 // pred_check_branch
    %14 = sbr.rel (0) target = $region13
  $region12: #{warp_pose_model_forward.1} parent=0 // pred_region
    _
  $region13: #{warp_pose_model_forward.1} parent=0 // pred_fallthru
    _
  // Predicated region
  $region14: #{warp_pose_model_forward.1} parent=0 // pred_check
    _
  $region15: #{warp_pose_model_forward.1} parent=0 // pred_check_branch
    %16 = sbr.rel (0) target = $region17
  $region16: #{warp_pose_model_forward.1} parent=0 // pred_region
    _
  $region17: #{warp_pose_model_forward.1} parent=0 // pred_fallthru
    _
  %v17 = vld [vmem:[%s0] sm:$0xff]
  %v18 = vld [vmem:[%s0 + $0x8] sm:$0xff]
  %v19 = vld [vmem:[%s1] sm:$0xff]
  %v20 = vld [vmem:[%s1 + $0x8] sm:$0xff]
  %v21 = vld [vmem:[%s1 + $0x10] sm:$0xff]
  %v22 = vld [vmem:[%s1 + $0x18] sm:$0xff]
  %v23 = vld [vmem:[%s2] sm:$0xff]
  %v24 = vld [vmem:[%s2 + $0x8] sm:$0xff]
  %v25 = vld [vmem:[%s2 + $0x10] sm:$0xff]
  %v26 = vld [vmem:[%s2 + $0x18] sm:$0xff]
  %28 = vset.pattern.permute.xlu0 0
  %29 = vperm.xlu0 %28, %v23
  %v30 = vpop.permute.xlu0 %29
  %33 = vset.pattern.permute.xlu0 0
  %34 = vperm.xlu0 %33, %v24
  %v35 = vpop.permute.xlu0 %34
  %38 = vset.pattern.permute.xlu0 0
  %39 = vperm.xlu0 %38, %v25
  %v40 = vpop.permute.xlu0 %39
  %43 = vset.pattern.permute.xlu0 0
  %44 = vperm.xlu0 %43, %v26
  %v45 = vpop.permute.xlu0 %44
  %vm47 = vcmask 64512
  %v49 = vsel %vm47, %v19, 0
  %v52 = vsel %vm47, %v20, 0
  %v55 = vsel %vm47, %v21, 0
  %v58 = vsel %vm47, %v22, 0
  %60 = vmatprep.subr.mxu0 %v18
  %61 = vmatpush1.msra.mxu0 %v17
  %62 = vmatprep.subr.mxu0 0.0
  %63 = vmatpush1.msra.mxu0 0.0
  %64 = vmatprep.subr.mxu0 0.0
  %65 = vmatpush1.msra.mxu0 0.0
  %66 = vmatprep.subr.mxu0 0.0
  %67 = vmatpush1.msra.mxu0 0.0
  %68 = vmatprep.subr.mxu0 0.0
  %69 = vmatpush1.msra.mxu0 0.0
  %70 = vmatprep.subr.mxu0 0.0
  %71 = vmatpush1.msra.mxu0 0.0
  %72 = vmatprep.subr.mxu0 0.0
  %73 = vmatpush1.msra.mxu0 0.0
  %74 = vmatprep.subr.mxu0 0.0
  %75 = vmatpush1.msra.mxu0 0.0
  %76 = vmatprep.subr.mxu0 0.0
  %77 = vmatpush1.msra.mxu0 0.0
  %78 = vmatprep.subr.mxu0 0.0
  %79 = vmatpush1.msra.mxu0 0.0
  %80 = vmatprep.subr.mxu0 0.0
  %81 = vmatpush1.msra.mxu0 0.0
  %82 = vmatprep.subr.mxu0 0.0
  %83 = vmatpush1.msra.mxu0 0.0
  %84 = vmatprep.subr.mxu0 0.0
  %85 = vmatpush1.msra.mxu0 0.0
  %86 = vmatprep.subr.mxu0 0.0
  %87 = vmatpush1.msra.mxu0 0.0
  %88 = vmatprep.subr.mxu0 0.0
  %89 = vmatpush1.msra.mxu0 0.0
  %90 = vmatprep.subr.mxu0 0.0
  %91 = vmatpush1.msra.mxu0 0.0
  %92 = vmatprep.subr.mxu0 0.0
  %93 = vmatpush1.msra.mxu0 0.0
  %94 = vmatprep.subr.mxu0 0.0
  %95 = vmatpush1.msra.mxu0 0.0
  %96 = vmatprep.subr.mxu0 0.0
  %97 = vmatpush1.msra.mxu0 0.0
  %98 = vmatprep.subr.mxu0 0.0
  %99 = vmatpush1.msra.mxu0 0.0
  %100 = vmatprep.subr.mxu0 0.0
  %101 = vmatpush1.msra.mxu0 0.0
  %102 = vmatprep.subr.mxu0 0.0
  %103 = vmatpush1.msra.mxu0 0.0
  %104 = vmatprep.subr.mxu0 0.0
  %105 = vmatpush1.msra.mxu0 0.0
  %106 = vmatprep.subr.mxu0 0.0
  %107 = vmatpush1.msra.mxu0 0.0
  %108 = vmatprep.subr.mxu0 0.0
  %109 = vmatpush1.msra.mxu0 0.0
  %110 = vmatprep.subr.mxu0 0.0
  %111 = vmatpush1.msra.mxu0 0.0
  %112 = vmatprep.subr.mxu0 0.0
  %113 = vmatpush1.msra.mxu0 0.0
  %114 = vmatprep.subr.mxu0 0.0
  %115 = vmatpush1.msra.mxu0 0.0
  %116 = vmatprep.subr.mxu0 0.0
  %117 = vmatpush1.msra.mxu0 0.0
  %118 = vmatprep.subr.mxu0 0.0
  %119 = vmatpush1.msra.mxu0 0.0
  %120 = vmatprep.subr.mxu0 0.0
  %121 = vmatpush1.msra.mxu0 0.0
  %122 = vmatprep.subr.mxu0 0.0
  %123 = vmatpush1.msra.mxu0 0.0
  %124 = vmatprep.mubr.f32.mxu0 0.0
  %125 = vmatmul.mubr.f32.gmra.mrb[0].mxu0 %v49
  %v126 = vpop.f32.mrb[0].mxu0
  %v127 = vadd.f32 %v30, %v126
  %v128 = vpop.f32.mrb[0].mxu0
  %v129 = vadd.f32 %v30, %v128
  %130 = vmatprep.mubr.f32.mxu0 0.0
  %131 = vmatmul.mubr.f32.gmra.mrb[0].mxu0 %v52
  %v132 = vpop.f32.mrb[0].mxu0
  %v133 = vadd.f32 %v35, %v132
  %v134 = vpop.f32.mrb[0].mxu0
  %v135 = vadd.f32 %v35, %v134
  %136 = vmatprep.mubr.f32.mxu0 0.0
  %137 = vmatmul.mubr.f32.gmra.mrb[0].mxu0 %v55
  %v138 = vpop.f32.mrb[0].mxu0
  %v139 = vadd.f32 %v40, %v138
  %v140 = vpop.f32.mrb[0].mxu0
  %v141 = vadd.f32 %v40, %v140
  %142 = vmatprep.mubr.f32.mxu0 0.0
  %143 = vmatmul.mubr.f32.gmra.mrb[0].mxu0 %v58
  %v144 = vpop.f32.mrb[0].mxu0
  %v145 = vadd.f32 %v45, %v144
  %v146 = vpop.f32.mrb[0].mxu0
  %v147 = vadd.f32 %v45, %v146
  %148 = vdwg.mxu0
  %v149 = vmax.f32 %v127, 0.0
  %v150 = vmax.f32 %v129, 0.0
  %v151 = vmax.f32 %v133, 0.0
  %v152 = vmax.f32 %v135, 0.0
  %v153 = vmax.f32 %v139, 0.0
  %v154 = vmax.f32 %v141, 0.0
  %v155 = vmax.f32 %v145, 0.0
  %v156 = vmax.f32 %v147, 0.0
  %v157 = vpack.c.bf16 %v151, %v149
  %v158 = vpack.c.bf16 %v152, %v150
  %v159 = vpack.c.bf16 %v155, %v153
  %v160 = vpack.c.bf16 %v156, %v154
  %v161 = vld [vmem:[%s3] sm:$0xff]
  %v162 = vld [vmem:[%s3 + $0x8] sm:$0xff]
  %v163 = vld [vmem:[%s3 + $0x10] sm:$0xff]
  %v164 = vld [vmem:[%s3 + $0x18] sm:$0xff]
  %v165 = vld [vmem:[%s3 + $0x20] sm:$0xff]
  %v166 = vld [vmem:[%s3 + $0x28] sm:$0xff]
  %v167 = vld [vmem:[%s3 + $0x30] sm:$0xff]
  %v168 = vld [vmem:[%s3 + $0x38] sm:$0xff]
  %v169 = vld [vmem:[%s3 + $0x40] sm:$0xff]
  %v170 = vld [vmem:[%s3 + $0x48] sm:$0xff]
  %v171 = vld [vmem:[%s3 + $0x50] sm:$0xff]
  %v172 = vld [vmem:[%s3 + $0x58] sm:$0xff]
  %v173 = vld [vmem:[%s3 + $0x60] sm:$0xff]
  %v174 = vld [vmem:[%s3 + $0x68] sm:$0xff]
  %v175 = vld [vmem:[%s3 + $0x70] sm:$0xff]
  %v176 = vld [vmem:[%s3 + $0x78] sm:$0xff]
  %v177 = vld [vmem:[%s3 + $0x80] sm:$0xff]
  %v178 = vld [vmem:[%s3 + $0x88] sm:$0xff]
  %v179 = vld [vmem:[%s3 + $0x90] sm:$0xff]
  %v180 = vld [vmem:[%s3 + $0x98] sm:$0xff]
  %v181 = vld [vmem:[%s3 + $0xa0] sm:$0xff]
  %v182 = vld [vmem:[%s3 + $0xa8] sm:$0xff]
  %v183 = vld [vmem:[%s3 + $0xb0] sm:$0xff]
  %v184 = vld [vmem:[%s3 + $0xb8] sm:$0xff]
  %v185 = vld [vmem:[%s3 + $0xc0] sm:$0xff]
  %v186 = vld [vmem:[%s3 + $0xc8] sm:$0xff]
  %v187 = vld [vmem:[%s3 + $0xd0] sm:$0xff]
  %v188 = vld [vmem:[%s3 + $0xd8] sm:$0xff]
  %v189 = vld [vmem:[%s3 + $0xe0] sm:$0xff]
  %v190 = vld [vmem:[%s3 + $0xe8] sm:$0xff]
  %v191 = vld [vmem:[%s3 + $0xf0] sm:$0xff]
  %v192 = vld [vmem:[%s3 + $0xf8] sm:$0xff]
  %v225 = vunpack.c.l.b16 %v161
  %v226 = vunpack.c.h.b16 %v161
  %v227 = vunpack.c.l.b16 %v162
  %v228 = vunpack.c.h.b16 %v162
  %v229 = vunpack.c.l.b16 %v163
  %v230 = vunpack.c.h.b16 %v163
  %v231 = vunpack.c.l.b16 %v164
  %v232 = vunpack.c.h.b16 %v164
  %v233 = vunpack.c.l.b16 %v165
  %v234 = vunpack.c.h.b16 %v165
  %v235 = vunpack.c.l.b16 %v166
  %v236 = vunpack.c.h.b16 %v166
  %v237 = vunpack.c.l.b16 %v167
  %v238 = vunpack.c.h.b16 %v167
  %v239 = vunpack.c.l.b16 %v168
  %v240 = vunpack.c.h.b16 %v168
  %v241 = vunpack.c.l.b16 %v169
  %v242 = vunpack.c.h.b16 %v169
  %v243 = vunpack.c.l.b16 %v170
  %v244 = vunpack.c.h.b16 %v170
  %v245 = vunpack.c.l.b16 %v171
  %v246 = vunpack.c.h.b16 %v171
  %v247 = vunpack.c.l.b16 %v172
  %v248 = vunpack.c.h.b16 %v172
  %v249 = vunpack.c.l.b16 %v173
  %v250 = vunpack.c.h.b16 %v173
  %v251 = vunpack.c.l.b16 %v174
  %v252 = vunpack.c.h.b16 %v174
  %v253 = vunpack.c.l.b16 %v175
  %v254 = vunpack.c.h.b16 %v175
  %v255 = vunpack.c.l.b16 %v176
  %v256 = vunpack.c.h.b16 %v176
  %v257 = vunpack.c.l.b16 %v177
  %v258 = vunpack.c.h.b16 %v177
  %v259 = vunpack.c.l.b16 %v178
  %v260 = vunpack.c.h.b16 %v178
  %v261 = vunpack.c.l.b16 %v179
  %v262 = vunpack.c.h.b16 %v179
  %v263 = vunpack.c.l.b16 %v180
  %v264 = vunpack.c.h.b16 %v180
  %v265 = vunpack.c.l.b16 %v181
  %v266 = vunpack.c.h.b16 %v181
  %v267 = vunpack.c.l.b16 %v182
  %v268 = vunpack.c.h.b16 %v182
  %v269 = vunpack.c.l.b16 %v183
  %v270 = vunpack.c.h.b16 %v183
  %v271 = vunpack.c.l.b16 %v184
  %v272 = vunpack.c.h.b16 %v184
  %v273 = vunpack.c.l.b16 %v185
  %v274 = vunpack.c.h.b16 %v185
  %v275 = vunpack.c.l.b16 %v186
  %v276 = vunpack.c.h.b16 %v186
  %v277 = vunpack.c.l.b16 %v187
  %v278 = vunpack.c.h.b16 %v187
  %v279 = vunpack.c.l.b16 %v188
  %v280 = vunpack.c.h.b16 %v188
  %v281 = vunpack.c.l.b16 %v189
  %v282 = vunpack.c.h.b16 %v189
  %v283 = vunpack.c.l.b16 %v190
  %v284 = vunpack.c.h.b16 %v190
  %v285 = vunpack.c.l.b16 %v191
  %v286 = vunpack.c.h.b16 %v191
  %v287 = vunpack.c.l.b16 %v192
  %v288 = vunpack.c.h.b16 %v192
  %v289 = vpack.c.b16 %v227, %v225
  %v290 = vpack.c.b16 %v228, %v226
  %v291 = vpack.c.b16 %v231, %v229
  %v292 = vpack.c.b16 %v232, %v230
  %v293 = vpack.c.b16 %v235, %v233
  %v294 = vpack.c.b16 %v236, %v234
  %v295 = vpack.c.b16 %v239, %v237
  %v296 = vpack.c.b16 %v240, %v238
  %v297 = vpack.c.b16 %v243, %v241
  %v298 = vpack.c.b16 %v244, %v242
  %v299 = vpack.c.b16 %v247, %v245
  %v300 = vpack.c.b16 %v248, %v246
  %v301 = vpack.c.b16 %v251, %v249
  %v302 = vpack.c.b16 %v252, %v250
  %v303 = vpack.c.b16 %v255, %v253
  %v304 = vpack.c.b16 %v256, %v254
  %v305 = vpack.c.b16 %v259, %v257
  %v306 = vpack.c.b16 %v260, %v258
  %v307 = vpack.c.b16 %v263, %v261
  %v308 = vpack.c.b16 %v264, %v262
  %v309 = vpack.c.b16 %v267, %v265
  %v310 = vpack.c.b16 %v268, %v266
  %v311 = vpack.c.b16 %v271, %v269
  %v312 = vpack.c.b16 %v272, %v270
  %v313 = vpack.c.b16 %v275, %v273
  %v314 = vpack.c.b16 %v276, %v274
  %v315 = vpack.c.b16 %v279, %v277
  %v316 = vpack.c.b16 %v280, %v278
  %v317 = vpack.c.b16 %v283, %v281
  %v318 = vpack.c.b16 %v284, %v282
  %v319 = vpack.c.b16 %v287, %v285
  %v320 = vpack.c.b16 %v288, %v286
  %353 = vmatprep.subr.bf16.mxu0 %v290
  %354 = vmatpush1.bf16.msra.mxu0 %v289
  %355 = vmatprep.subr.bf16.mxu0 %v292
  %356 = vmatpush1.bf16.msra.mxu0 %v291
  %357 = vmatprep.subr.bf16.mxu0 %v294
  %358 = vmatpush1.bf16.msra.mxu0 %v293
  %359 = vmatprep.subr.bf16.mxu0 %v296
  %360 = vmatpush1.bf16.msra.mxu0 %v295
  %361 = vmatprep.subr.bf16.mxu0 %v298
  %362 = vmatpush1.bf16.msra.mxu0 %v297
  %363 = vmatprep.subr.bf16.mxu0 %v300
  %364 = vmatpush1.bf16.msra.mxu0 %v299
  %365 = vmatprep.subr.bf16.mxu0 %v302
  %366 = vmatpush1.bf16.msra.mxu0 %v301
  %367 = vmatprep.subr.bf16.mxu0 %v304
  %368 = vmatpush1.bf16.msra.mxu0 %v303
  %369 = vmatprep.subr.bf16.mxu0 %v306
  %370 = vmatpush1.bf16.msra.mxu0 %v305
  %371 = vmatprep.subr.bf16.mxu0 %v308
  %372 = vmatpush1.bf16.msra.mxu0 %v307
  %373 = vmatprep.subr.bf16.mxu0 %v310
  %374 = vmatpush1.bf16.msra.mxu0 %v309
  %375 = vmatprep.subr.bf16.mxu0 %v312
  %376 = vmatpush1.bf16.msra.mxu0 %v311
  %377 = vmatprep.subr.bf16.mxu0 %v314
  %378 = vmatpush1.bf16.msra.mxu0 %v313
  %379 = vmatprep.subr.bf16.mxu0 %v316
  %380 = vmatpush1.bf16.msra.mxu0 %v315
  %381 = vmatprep.subr.bf16.mxu0 %v318
  %382 = vmatpush1.bf16.msra.mxu0 %v317
  %383 = vmatprep.subr.bf16.mxu0 %v320
  %384 = vmatpush1.bf16.msra.mxu0 %v319
  %385 = vmatprep.mubr.bf16.mxu0 %v158
  %386 = vmatmul.mubr.bf16.gmra.mrb[0].mxu0 %v157
  %v387 = vpop.f32.mrb[0].mxu0
  %v388 = vadd.f32 0.0, %v387
  %v389 = vpop.f32.mrb[0].mxu0
  %v390 = vadd.f32 0.0, %v389
  %v391 = vpop.f32.mrb[0].mxu0
  %v392 = vadd.f32 0.0, %v391
  %v393 = vpop.f32.mrb[0].mxu0
  %v394 = vadd.f32 0.0, %v393
  %395 = vmatprep.mubr.bf16.mxu0 %v160
  %396 = vmatmul.mubr.bf16.gmra.mrb[0].mxu0 %v159
  %v397 = vpop.f32.mrb[0].mxu0
  %v398 = vadd.f32 0.0, %v397
  %v399 = vpop.f32.mrb[0].mxu0
  %v400 = vadd.f32 0.0, %v399
  %v401 = vpop.f32.mrb[0].mxu0
  %v402 = vadd.f32 0.0, %v401
  %v403 = vpop.f32.mrb[0].mxu0
  %v404 = vadd.f32 0.0, %v403
  %405 = vdwg.mxu0
  %v406 = vmul.f32 %v149, %v388
  %v407 = vmul.f32 %v150, %v390
  %v408 = vmul.f32 %v151, %v392
  %v409 = vmul.f32 %v152, %v394
  %v410 = vmul.f32 %v153, %v398
  %v411 = vmul.f32 %v154, %v400
  %v412 = vmul.f32 %v155, %v402
  %v413 = vmul.f32 %v156, %v404
  %v414 = vadd.f32 %v406, %v408
  %v415 = vadd.f32 %v414, %v410
  %v416 = vadd.f32 %v415, %v412
  %v417 = vrot.slane %v416, 4
  %v418 = vadd.f32 %v416, %v417
  %v419 = vrot.slane %v418, 2
  %v420 = vadd.f32 %v418, %v419
  %v421 = vrot.slane %v420, 1
  %v422 = vadd.f32 %v420, %v421
  %v423 = vadd.f32 %v407, %v409
  %v424 = vadd.f32 %v423, %v411
  %v425 = vadd.f32 %v424, %v413
  %v426 = vrot.slane %v425, 4
  %v427 = vadd.f32 %v425, %v426
  %v428 = vrot.slane %v427, 2
  %v429 = vadd.f32 %v427, %v428
  %v430 = vrot.slane %v429, 1
  %v431 = vadd.f32 %v429, %v430
  %v432 = vmul.f32 %v422, 0.088388346
  %v433 = vmul.f32 %v431, 0.088388346
  %s434 = scalar_lea.vmem %s3, 256
  %v435 = vld [vmem:[%s434] sm:$0xff]
  %v436 = vld [vmem:[%s434 + $0x8] sm:$0xff]
  %v437 = vld [vmem:[%s434 + $0x10] sm:$0xff]
  %v438 = vld [vmem:[%s434 + $0x18] sm:$0xff]
  %v439 = vld [vmem:[%s434 + $0x20] sm:$0xff]
  %v440 = vld [vmem:[%s434 + $0x28] sm:$0xff]
  %v441 = vld [vmem:[%s434 + $0x30] sm:$0xff]
  %v442 = vld [vmem:[%s434 + $0x38] sm:$0xff]
  %v443 = vld [vmem:[%s434 + $0x40] sm:$0xff]
  %v444 = vld [vmem:[%s434 + $0x48] sm:$0xff]
  %v445 = vld [vmem:[%s434 + $0x50] sm:$0xff]
  %v446 = vld [vmem:[%s434 + $0x58] sm:$0xff]
  %v447 = vld [vmem:[%s434 + $0x60] sm:$0xff]
  %v448 = vld [vmem:[%s434 + $0x68] sm:$0xff]
  %v449 = vld [vmem:[%s434 + $0x70] sm:$0xff]
  %v450 = vld [vmem:[%s434 + $0x78] sm:$0xff]
  %v451 = vld [vmem:[%s434 + $0x80] sm:$0xff]
  %v452 = vld [vmem:[%s434 + $0x88] sm:$0xff]
  %v453 = vld [vmem:[%s434 + $0x90] sm:$0xff]
  %v454 = vld [vmem:[%s434 + $0x98] sm:$0xff]
  %v455 = vld [vmem:[%s434 + $0xa0] sm:$0xff]
  %v456 = vld [vmem:[%s434 + $0xa8] sm:$0xff]
  %v457 = vld [vmem:[%s434 + $0xb0] sm:$0xff]
  %v458 = vld [vmem:[%s434 + $0xb8] sm:$0xff]
  %v459 = vld [vmem:[%s434 + $0xc0] sm:$0xff]
  %v460 = vld [vmem:[%s434 + $0xc8] sm:$0xff]
  %v461 = vld [vmem:[%s434 + $0xd0] sm:$0xff]
  %v462 = vld [vmem:[%s434 + $0xd8] sm:$0xff]
  %v463 = vld [vmem:[%s434 + $0xe0] sm:$0xff]
  %v464 = vld [vmem:[%s434 + $0xe8] sm:$0xff]
  %v465 = vld [vmem:[%s434 + $0xf0] sm:$0xff]
  %v466 = vld [vmem:[%s434 + $0xf8] sm:$0xff]
  %v499 = vunpack.c.l.b16 %v435
  %v500 = vunpack.c.h.b16 %v435
  %v501 = vunpack.c.l.b16 %v436
  %v502 = vunpack.c.h.b16 %v436
  %v503 = vunpack.c.l.b16 %v437
  %v504 = vunpack.c.h.b16 %v437
  %v505 = vunpack.c.l.b16 %v438
  %v506 = vunpack.c.h.b16 %v438
  %v507 = vunpack.c.l.b16 %v439
  %v508 = vunpack.c.h.b16 %v439
  %v509 = vunpack.c.l.b16 %v440
  %v510 = vunpack.c.h.b16 %v440
  %v511 = vunpack.c.l.b16 %v441
  %v512 = vunpack.c.h.b16 %v441
  %v513 = vunpack.c.l.b16 %v442
  %v514 = vunpack.c.h.b16 %v442
  %v515 = vunpack.c.l.b16 %v443
  %v516 = vunpack.c.h.b16 %v443
  %v517 = vunpack.c.l.b16 %v444
  %v518 = vunpack.c.h.b16 %v444
  %v519 = vunpack.c.l.b16 %v445
  %v520 = vunpack.c.h.b16 %v445
  %v521 = vunpack.c.l.b16 %v446
  %v522 = vunpack.c.h.b16 %v446
  %v523 = vunpack.c.l.b16 %v447
  %v524 = vunpack.c.h.b16 %v447
  %v525 = vunpack.c.l.b16 %v448
  %v526 = vunpack.c.h.b16 %v448
  %v527 = vunpack.c.l.b16 %v449
  %v528 = vunpack.c.h.b16 %v449
  %v529 = vunpack.c.l.b16 %v450
  %v530 = vunpack.c.h.b16 %v450
  %v531 = vunpack.c.l.b16 %v451
  %v532 = vunpack.c.h.b16 %v451
  %v533 = vunpack.c.l.b16 %v452
  %v534 = vunpack.c.h.b16 %v452
  %v535 = vunpack.c.l.b16 %v453
  %v536 = vunpack.c.h.b16 %v453
  %v537 = vunpack.c.l.b16 %v454
  %v538 = vunpack.c.h.b16 %v454
  %v539 = vunpack.c.l.b16 %v455
  %v540 = vunpack.c.h.b16 %v455
  %v541 = vunpack.c.l.b16 %v456
  %v542 = vunpack.c.h.b16 %v456
  %v543 = vunpack.c.l.b16 %v457
  %v544 = vunpack.c.h.b16 %v457
  %v545 = vunpack.c.l.b16 %v458
  %v546 = vunpack.c.h.b16 %v458
  %v547 = vunpack.c.l.b16 %v459
  %v548 = vunpack.c.h.b16 %v459
  %v549 = vunpack.c.l.b16 %v460
  %v550 = vunpack.c.h.b16 %v460
  %v551 = vunpack.c.l.b16 %v461
  %v552 = vunpack.c.h.b16 %v461
  %v553 = vunpack.c.l.b16 %v462
  %v554 = vunpack.c.h.b16 %v462
  %v555 = vunpack.c.l.b16 %v463
  %v556 = vunpack.c.h.b16 %v463
  %v557 = vunpack.c.l.b16 %v464
  %v558 = vunpack.c.h.b16 %v464
  %v559 = vunpack.c.l.b16 %v465
  %v560 = vunpack.c.h.b16 %v465
  %v561 = vunpack.c.l.b16 %v466
  %v562 = vunpack.c.h.b16 %v466
  %v563 = vpack.c.b16 %v501, %v499
  %v564 = vpack.c.b16 %v502, %v500
  %v565 = vpack.c.b16 %v505, %v503
  %v566 = vpack.c.b16 %v506, %v504
  %v567 = vpack.c.b16 %v509, %v507
  %v568 = vpack.c.b16 %v510, %v508
  %v569 = vpack.c.b16 %v513, %v511
  %v570 = vpack.c.b16 %v514, %v512
  %v571 = vpack.c.b16 %v517, %v515
  %v572 = vpack.c.b16 %v518, %v516
  %v573 = vpack.c.b16 %v521, %v519
  %v574 = vpack.c.b16 %v522, %v520
  %v575 = vpack.c.b16 %v525, %v523
  %v576 = vpack.c.b16 %v526, %v524
  %v577 = vpack.c.b16 %v529, %v527
  %v578 = vpack.c.b16 %v530, %v528
  %v579 = vpack.c.b16 %v533, %v531
  %v580 = vpack.c.b16 %v534, %v532
  %v581 = vpack.c.b16 %v537, %v535
  %v582 = vpack.c.b16 %v538, %v536
  %v583 = vpack.c.b16 %v541, %v539
  %v584 = vpack.c.b16 %v542, %v540
  %v585 = vpack.c.b16 %v545, %v543
  %v586 = vpack.c.b16 %v546, %v544
  %v587 = vpack.c.b16 %v549, %v547
  %v588 = vpack.c.b16 %v550, %v548
  %v589 = vpack.c.b16 %v553, %v551
  %v590 = vpack.c.b16 %v554, %v552
  %v591 = vpack.c.b16 %v557, %v555
  %v592 = vpack.c.b16 %v558, %v556
  %v593 = vpack.c.b16 %v561, %v559
  %v594 = vpack.c.b16 %v562, %v560
  %627 = vmatprep.subr.bf16.mxu0 %v564
  %628 = vmatpush1.bf16.msra.mxu0 %v563
  %629 = vmatprep.subr.bf16.mxu0 %v566
  %630 = vmatpush1.bf16.msra.mxu0 %v565
  %631 = vmatprep.subr.bf16.mxu0 %v568
  %632 = vmatpush1.bf16.msra.mxu0 %v567
  %633 = vmatprep.subr.bf16.mxu0 %v570
  %634 = vmatpush1.bf16.msra.mxu0 %v569
  %635 = vmatprep.subr.bf16.mxu0 %v572
  %636 = vmatpush1.bf16.msra.mxu0 %v571
  %637 = vmatprep.subr.bf16.mxu0 %v574
  %638 = vmatpush1.bf16.msra.mxu0 %v573
  %639 = vmatprep.subr.bf16.mxu0 %v576
  %640 = vmatpush1.bf16.msra.mxu0 %v575
  %641 = vmatprep.subr.bf16.mxu0 %v578
  %642 = vmatpush1.bf16.msra.mxu0 %v577
  %643 = vmatprep.subr.bf16.mxu0 %v580
  %644 = vmatpush1.bf16.msra.mxu0 %v579
  %645 = vmatprep.subr.bf16.mxu0 %v582
  %646 = vmatpush1.bf16.msra.mxu0 %v581
  %647 = vmatprep.subr.bf16.mxu0 %v584
  %648 = vmatpush1.bf16.msra.mxu0 %v583
  %649 = vmatprep.subr.bf16.mxu0 %v586
  %650 = vmatpush1.bf16.msra.mxu0 %v585
  %651 = vmatprep.subr.bf16.mxu0 %v588
  %652 = vmatpush1.bf16.msra.mxu0 %v587
  %653 = vmatprep.subr.bf16.mxu0 %v590
  %654 = vmatpush1.bf16.msra.mxu0 %v589
  %655 = vmatprep.subr.bf16.mxu0 %v592
  %656 = vmatpush1.bf16.msra.mxu0 %v591
  %657 = vmatprep.subr.bf16.mxu0 %v594
  %658 = vmatpush1.bf16.msra.mxu0 %v593
  %659 = vmatprep.mubr.bf16.mxu0 %v158
  %660 = vmatmul.mubr.bf16.gmra.mrb[0].mxu0 %v157
  %v661 = vpop.f32.mrb[0].mxu0
  %v662 = vadd.f32 0.0, %v661
  %v663 = vpop.f32.mrb[0].mxu0
  %v664 = vadd.f32 0.0, %v663
  %v665 = vpop.f32.mrb[0].mxu0
  %v666 = vadd.f32 0.0, %v665
  %v667 = vpop.f32.mrb[0].mxu0
  %v668 = vadd.f32 0.0, %v667
  %669 = vmatprep.mubr.bf16.mxu0 %v160
  %670 = vmatmul.mubr.bf16.gmra.mrb[0].mxu0 %v159
  %v671 = vpop.f32.mrb[0].mxu0
  %v672 = vadd.f32 0.0, %v671
  %v673 = vpop.f32.mrb[0].mxu0
  %v674 = vadd.f32 0.0, %v673
  %v675 = vpop.f32.mrb[0].mxu0
  %v676 = vadd.f32 0.0, %v675
  %v677 = vpop.f32.mrb[0].mxu0
  %v678 = vadd.f32 0.0, %v677
  %679 = vdwg.mxu0
  %v680 = vmul.f32 %v149, %v662
  %v681 = vmul.f32 %v150, %v664
  %v682 = vmul.f32 %v151, %v666
  %v683 = vmul.f32 %v152, %v668
  %v684 = vmul.f32 %v153, %v672
  %v685 = vmul.f32 %v154, %v674
  %v686 = vmul.f32 %v155, %v676
  %v687 = vmul.f32 %v156, %v678
  %v688 = vadd.f32 %v680, %v682
  %v689 = vadd.f32 %v688, %v684
  %v690 = vadd.f32 %v689, %v686
  %v691 = vrot.slane %v690, 4
  %v692 = vadd.f32 %v690, %v691
  %v693 = vrot.slane %v692, 2
  %v694 = vadd.f32 %v692, %v693
  %v695 = vrot.slane %v694, 1
  %v696 = vadd.f32 %v694, %v695
  %v697 = vadd.f32 %v681, %v683
  %v698 = vadd.f32 %v697, %v685
  %v699 = vadd.f32 %v698, %v687
  %v700 = vrot.slane %v699, 4
  %v701 = vadd.f32 %v699, %v700
  %v702 = vrot.slane %v701, 2
  %v703 = vadd.f32 %v701, %v702
  %v704 = vrot.slane %v703, 1
  %v705 = vadd.f32 %v703, %v704
  %v706 = vmul.f32 %v696, 0.088388346
  %v707 = vmul.f32 %v705, 0.088388346
  %s708 = scalar_lea.vmem %s3, 512
  %v709 = vld [vmem:[%s708] sm:$0xff]
  %v710 = vld [vmem:[%s708 + $0x8] sm:$0xff]
  %v711 = vld [vmem:[%s708 + $0x10] sm:$0xff]
  %v712 = vld [vmem:[%s708 + $0x18] sm:$0xff]
  %v713 = vld [vmem:[%s708 + $0x20] sm:$0xff]
  %v714 = vld [vmem:[%s708 + $0x28] sm:$0xff]
  %v715 = vld [vmem:[%s708 + $0x30] sm:$0xff]
  %v716 = vld [vmem:[%s708 + $0x38] sm:$0xff]
  %v717 = vld [vmem:[%s708 + $0x40] sm:$0xff]
  %v718 = vld [vmem:[%s708 + $0x48] sm:$0xff]
  %v719 = vld [vmem:[%s708 + $0x50] sm:$0xff]
  %v720 = vld [vmem:[%s708 + $0x58] sm:$0xff]
  %v721 = vld [vmem:[%s708 + $0x60] sm:$0xff]
  %v722 = vld [vmem:[%s708 + $0x68] sm:$0xff]
  %v723 = vld [vmem:[%s708 + $0x70] sm:$0xff]
  %v724 = vld [vmem:[%s708 + $0x78] sm:$0xff]
  %v725 = vld [vmem:[%s708 + $0x80] sm:$0xff]
  %v726 = vld [vmem:[%s708 + $0x88] sm:$0xff]
  %v727 = vld [vmem:[%s708 + $0x90] sm:$0xff]
  %v728 = vld [vmem:[%s708 + $0x98] sm:$0xff]
  %v729 = vld [vmem:[%s708 + $0xa0] sm:$0xff]
  %v730 = vld [vmem:[%s708 + $0xa8] sm:$0xff]
  %v731 = vld [vmem:[%s708 + $0xb0] sm:$0xff]
  %v732 = vld [vmem:[%s708 + $0xb8] sm:$0xff]
  %v733 = vld [vmem:[%s708 + $0xc0] sm:$0xff]
  %v734 = vld [vmem:[%s708 + $0xc8] sm:$0xff]
  %v735 = vld [vmem:[%s708 + $0xd0] sm:$0xff]
  %v736 = vld [vmem:[%s708 + $0xd8] sm:$0xff]
  %v737 = vld [vmem:[%s708 + $0xe0] sm:$0xff]
  %v738 = vld [vmem:[%s708 + $0xe8] sm:$0xff]
  %v739 = vld [vmem:[%s708 + $0xf0] sm:$0xff]
  %v740 = vld [vmem:[%s708 + $0xf8] sm:$0xff]
  %v773 = vunpack.c.l.b16 %v709
  %v774 = vunpack.c.h.b16 %v709
  %v775 = vunpack.c.l.b16 %v710
  %v776 = vunpack.c.h.b16 %v710
  %v777 = vunpack.c.l.b16 %v711
  %v778 = vunpack.c.h.b16 %v711
  %v779 = vunpack.c.l.b16 %v712
  %v780 = vunpack.c.h.b16 %v712
  %v781 = vunpack.c.l.b16 %v713
  %v782 = vunpack.c.h.b16 %v713
  %v783 = vunpack.c.l.b16 %v714
  %v784 = vunpack.c.h.b16 %v714
  %v785 = vunpack.c.l.b16 %v715
  %v786 = vunpack.c.h.b16 %v715
  %v787 = vunpack.c.l.b16 %v716
  %v788 = vunpack.c.h.b16 %v716
  %v789 = vunpack.c.l.b16 %v717
  %v790 = vunpack.c.h.b16 %v717
  %v791 = vunpack.c.l.b16 %v718
  %v792 = vunpack.c.h.b16 %v718
  %v793 = vunpack.c.l.b16 %v719
  %v794 = vunpack.c.h.b16 %v719
  %v795 = vunpack.c.l.b16 %v720
  %v796 = vunpack.c.h.b16 %v720
  %v797 = vunpack.c.l.b16 %v721
  %v798 = vunpack.c.h.b16 %v721
  %v799 = vunpack.c.l.b16 %v722
  %v800 = vunpack.c.h.b16 %v722
  %v801 = vunpack.c.l.b16 %v723
  %v802 = vunpack.c.h.b16 %v723
  %v803 = vunpack.c.l.b16 %v724
  %v804 = vunpack.c.h.b16 %v724
  %v805 = vunpack.c.l.b16 %v725
  %v806 = vunpack.c.h.b16 %v725
  %v807 = vunpack.c.l.b16 %v726
  %v808 = vunpack.c.h.b16 %v726
  %v809 = vunpack.c.l.b16 %v727
  %v810 = vunpack.c.h.b16 %v727
  %v811 = vunpack.c.l.b16 %v728
  %v812 = vunpack.c.h.b16 %v728
  %v813 = vunpack.c.l.b16 %v729
  %v814 = vunpack.c.h.b16 %v729
  %v815 = vunpack.c.l.b16 %v730
  %v816 = vunpack.c.h.b16 %v730
  %v817 = vunpack.c.l.b16 %v731
  %v818 = vunpack.c.h.b16 %v731
  %v819 = vunpack.c.l.b16 %v732
  %v820 = vunpack.c.h.b16 %v732
  %v821 = vunpack.c.l.b16 %v733
  %v822 = vunpack.c.h.b16 %v733
  %v823 = vunpack.c.l.b16 %v734
  %v824 = vunpack.c.h.b16 %v734
  %v825 = vunpack.c.l.b16 %v735
  %v826 = vunpack.c.h.b16 %v735
  %v827 = vunpack.c.l.b16 %v736
  %v828 = vunpack.c.h.b16 %v736
  %v829 = vunpack.c.l.b16 %v737
  %v830 = vunpack.c.h.b16 %v737
  %v831 = vunpack.c.l.b16 %v738
  %v832 = vunpack.c.h.b16 %v738
  %v833 = vunpack.c.l.b16 %v739
  %v834 = vunpack.c.h.b16 %v739
  %v835 = vunpack.c.l.b16 %v740
  %v836 = vunpack.c.h.b16 %v740
  %v837 = vpack.c.b16 %v775, %v773
  %v838 = vpack.c.b16 %v776, %v774
  %v839 = vpack.c.b16 %v779, %v777
  %v840 = vpack.c.b16 %v780, %v778
  %v841 = vpack.c.b16 %v783, %v781
  %v842 = vpack.c.b16 %v784, %v782
  %v843 = vpack.c.b16 %v787, %v785
  %v844 = vpack.c.b16 %v788, %v786
  %v845 = vpack.c.b16 %v791, %v789
  %v846 = vpack.c.b16 %v792, %v790
  %v847 = vpack.c.b16 %v795, %v793
  %v848 = vpack.c.b16 %v796, %v794
  %v849 = vpack.c.b16 %v799, %v797
  %v850 = vpack.c.b16 %v800, %v798
  %v851 = vpack.c.b16 %v803, %v801
  %v852 = vpack.c.b16 %v804, %v802
  %v853 = vpack.c.b16 %v807, %v805
  %v854 = vpack.c.b16 %v808, %v806
  %v855 = vpack.c.b16 %v811, %v809
  %v856 = vpack.c.b16 %v812, %v810
  %v857 = vpack.c.b16 %v815, %v813
  %v858 = vpack.c.b16 %v816, %v814
  %v859 = vpack.c.b16 %v819, %v817
  %v860 = vpack.c.b16 %v820, %v818
  %v861 = vpack.c.b16 %v823, %v821
  %v862 = vpack.c.b16 %v824, %v822
  %v863 = vpack.c.b16 %v827, %v825
  %v864 = vpack.c.b16 %v828, %v826
  %v865 = vpack.c.b16 %v831, %v829
  %v866 = vpack.c.b16 %v832, %v830
  %v867 = vpack.c.b16 %v835, %v833
  %v868 = vpack.c.b16 %v836, %v834
  %901 = vmatprep.subr.bf16.mxu0 %v838
  %902 = vmatpush1.bf16.msra.mxu0 %v837
  %903 = vmatprep.subr.bf16.mxu0 %v840
  %904 = vmatpush1.bf16.msra.mxu0 %v839
  %905 = vmatprep.subr.bf16.mxu0 %v842
  %906 = vmatpush1.bf16.msra.mxu0 %v841
  %907 = vmatprep.subr.bf16.mxu0 %v844
  %908 = vmatpush1.bf16.msra.mxu0 %v843
  %909 = vmatprep.subr.bf16.mxu0 %v846
  %910 = vmatpush1.bf16.msra.mxu0 %v845
  %911 = vmatprep.subr.bf16.mxu0 %v848
  %912 = vmatpush1.bf16.msra.mxu0 %v847
  %913 = vmatprep.subr.bf16.mxu0 %v850
  %914 = vmatpush1.bf16.msra.mxu0 %v849
  %915 = vmatprep.subr.bf16.mxu0 %v852
  %916 = vmatpush1.bf16.msra.mxu0 %v851
  %917 = vmatprep.subr.bf16.mxu0 %v854
  %918 = vmatpush1.bf16.msra.mxu0 %v853
  %919 = vmatprep.subr.bf16.mxu0 %v856
  %920 = vmatpush1.bf16.msra.mxu0 %v855
  %921 = vmatprep.subr.bf16.mxu0 %v858
  %922 = vmatpush1.bf16.msra.mxu0 %v857
  %923 = vmatprep.subr.bf16.mxu0 %v860
  %924 = vmatpush1.bf16.msra.mxu0 %v859
  %925 = vmatprep.subr.bf16.mxu0 %v862
  %926 = vmatpush1.bf16.msra.mxu0 %v861
  %927 = vmatprep.subr.bf16.mxu0 %v864
  %928 = vmatpush1.bf16.msra.mxu0 %v863
  %929 = vmatprep.subr.bf16.mxu0 %v866
  %930 = vmatpush1.bf16.msra.mxu0 %v865
  %931 = vmatprep.subr.bf16.mxu0 %v868
  %932 = vmatpush1.bf16.msra.mxu0 %v867
  %933 = vmatprep.mubr.bf16.mxu0 %v158
  %934 = vmatmul.mubr.bf16.gmra.mrb[0].mxu0 %v157
  %v935 = vpop.f32.mrb[0].mxu0
  %v936 = vadd.f32 0.0, %v935
  %v937 = vpop.f32.mrb[0].mxu0
  %v938 = vadd.f32 0.0, %v937
  %v939 = vpop.f32.mrb[0].mxu0
  %v940 = vadd.f32 0.0, %v939
  %v941 = vpop.f32.mrb[0].mxu0
  %v942 = vadd.f32 0.0, %v941
  %943 = vmatprep.mubr.bf16.mxu0 %v160
  %944 = vmatmul.mubr.bf16.gmra.mrb[0].mxu0 %v159
  %v945 = vpop.f32.mrb[0].mxu0
  %v946 = vadd.f32 0.0, %v945
  %v947 = vpop.f32.mrb[0].mxu0
  %v948 = vadd.f32 0.0, %v947
  %v949 = vpop.f32.mrb[0].mxu0
  %v950 = vadd.f32 0.0, %v949
  %v951 = vpop.f32.mrb[0].mxu0
  %v952 = vadd.f32 0.0, %v951
  %953 = vdwg.mxu0
  %v954 = vmul.f32 %v149, %v936
  %v955 = vmul.f32 %v150, %v938
  %v956 = vmul.f32 %v151, %v940
  %v957 = vmul.f32 %v152, %v942
  %v958 = vmul.f32 %v153, %v946
  %v959 = vmul.f32 %v154, %v948
  %v960 = vmul.f32 %v155, %v950
  %v961 = vmul.f32 %v156, %v952
  %v962 = vadd.f32 %v954, %v956
  %v963 = vadd.f32 %v962, %v958
  %v964 = vadd.f32 %v963, %v960
  %v965 = vrot.slane %v964, 4
  %v966 = vadd.f32 %v964, %v965
  %v967 = vrot.slane %v966, 2
  %v968 = vadd.f32 %v966, %v967
  %v969 = vrot.slane %v968, 1
  %v970 = vadd.f32 %v968, %v969
  %v971 = vadd.f32 %v955, %v957
  %v972 = vadd.f32 %v971, %v959
  %v973 = vadd.f32 %v972, %v961
  %v974 = vrot.slane %v973, 4
  %v975 = vadd.f32 %v973, %v974
  %v976 = vrot.slane %v975, 2
  %v977 = vadd.f32 %v975, %v976
  %v978 = vrot.slane %v977, 1
  %v979 = vadd.f32 %v977, %v978
  %v980 = vmul.f32 %v970, 0.088388346
  %v981 = vmul.f32 %v979, 0.088388346
  %s982 = scalar_lea.vmem %s3, 768
  %v983 = vld [vmem:[%s982] sm:$0xff]
  %v984 = vld [vmem:[%s982 + $0x8] sm:$0xff]
  %v985 = vld [vmem:[%s982 + $0x10] sm:$0xff]
  %v986 = vld [vmem:[%s982 + $0x18] sm:$0xff]
  %v987 = vld [vmem:[%s982 + $0x20] sm:$0xff]
  %v988 = vld [vmem:[%s982 + $0x28] sm:$0xff]
  %v989 = vld [vmem:[%s982 + $0x30] sm:$0xff]
  %v990 = vld [vmem:[%s982 + $0x38] sm:$0xff]
  %v991 = vld [vmem:[%s982 + $0x40] sm:$0xff]
  %v992 = vld [vmem:[%s982 + $0x48] sm:$0xff]
  %v993 = vld [vmem:[%s982 + $0x50] sm:$0xff]
  %v994 = vld [vmem:[%s982 + $0x58] sm:$0xff]
  %v995 = vld [vmem:[%s982 + $0x60] sm:$0xff]
  %v996 = vld [vmem:[%s982 + $0x68] sm:$0xff]
  %v997 = vld [vmem:[%s982 + $0x70] sm:$0xff]
  %v998 = vld [vmem:[%s982 + $0x78] sm:$0xff]
  %v999 = vld [vmem:[%s982 + $0x80] sm:$0xff]
  %v1000 = vld [vmem:[%s982 + $0x88] sm:$0xff]
  %v1001 = vld [vmem:[%s982 + $0x90] sm:$0xff]
  %v1002 = vld [vmem:[%s982 + $0x98] sm:$0xff]
  %v1003 = vld [vmem:[%s982 + $0xa0] sm:$0xff]
  %v1004 = vld [vmem:[%s982 + $0xa8] sm:$0xff]
  %v1005 = vld [vmem:[%s982 + $0xb0] sm:$0xff]
  %v1006 = vld [vmem:[%s982 + $0xb8] sm:$0xff]
  %v1007 = vld [vmem:[%s982 + $0xc0] sm:$0xff]
  %v1008 = vld [vmem:[%s982 + $0xc8] sm:$0xff]
  %v1009 = vld [vmem:[%s982 + $0xd0] sm:$0xff]
  %v1010 = vld [vmem:[%s982 + $0xd8] sm:$0xff]
  %v1011 = vld [vmem:[%s982 + $0xe0] sm:$0xff]
  %v1012 = vld [vmem:[%s982 + $0xe8] sm:$0xff]
  %v1013 = vld [vmem:[%s982 + $0xf0] sm:$0xff]
  %v1014 = vld [vmem:[%s982 + $0xf8] sm:$0xff]
  %v1047 = vunpack.c.l.b16 %v983
  %v1048 = vunpack.c.h.b16 %v983
  %v1049 = vunpack.c.l.b16 %v984
  %v1050 = vunpack.c.h.b16 %v984
  %v1051 = vunpack.c.l.b16 %v985
  %v1052 = vunpack.c.h.b16 %v985
  %v1053 = vunpack.c.l.b16 %v986
  %v1054 = vunpack.c.h.b16 %v986
  %v1055 = vunpack.c.l.b16 %v987
  %v1056 = vunpack.c.h.b16 %v987
  %v1057 = vunpack.c.l.b16 %v988
  %v1058 = vunpack.c.h.b16 %v988
  %v1059 = vunpack.c.l.b16 %v989
  %v1060 = vunpack.c.h.b16 %v989
  %v1061 = vunpack.c.l.b16 %v990
  %v1062 = vunpack.c.h.b16 %v990
  %v1063 = vunpack.c.l.b16 %v991
  %v1064 = vunpack.c.h.b16 %v991
  %v1065 = vunpack.c.l.b16 %v992
  %v1066 = vunpack.c.h.b16 %v992
  %v1067 = vunpack.c.l.b16 %v993
  %v1068 = vunpack.c.h.b16 %v993
  %v1069 = vunpack.c.l.b16 %v994
  %v1070 = vunpack.c.h.b16 %v994
  %v1071 = vunpack.c.l.b16 %v995
  %v1072 = vunpack.c.h.b16 %v995
  %v1073 = vunpack.c.l.b16 %v996
  %v1074 = vunpack.c.h.b16 %v996
  %v1075 = vunpack.c.l.b16 %v997
  %v1076 = vunpack.c.h.b16 %v997
  %v1077 = vunpack.c.l.b16 %v998
  %v1078 = vunpack.c.h.b16 %v998
  %v1079 = vunpack.c.l.b16 %v999
  %v1080 = vunpack.c.h.b16 %v999
  %v1081 = vunpack.c.l.b16 %v1000
  %v1082 = vunpack.c.h.b16 %v1000
  %v1083 = vunpack.c.l.b16 %v1001
  %v1084 = vunpack.c.h.b16 %v1001
  %v1085 = vunpack.c.l.b16 %v1002
  %v1086 = vunpack.c.h.b16 %v1002
  %v1087 = vunpack.c.l.b16 %v1003
  %v1088 = vunpack.c.h.b16 %v1003
  %v1089 = vunpack.c.l.b16 %v1004
  %v1090 = vunpack.c.h.b16 %v1004
  %v1091 = vunpack.c.l.b16 %v1005
  %v1092 = vunpack.c.h.b16 %v1005
  %v1093 = vunpack.c.l.b16 %v1006
  %v1094 = vunpack.c.h.b16 %v1006
  %v1095 = vunpack.c.l.b16 %v1007
  %v1096 = vunpack.c.h.b16 %v1007
  %v1097 = vunpack.c.l.b16 %v1008
  %v1098 = vunpack.c.h.b16 %v1008
  %v1099 = vunpack.c.l.b16 %v1009
  %v1100 = vunpack.c.h.b16 %v1009
  %v1101 = vunpack.c.l.b16 %v1010
  %v1102 = vunpack.c.h.b16 %v1010
  %v1103 = vunpack.c.l.b16 %v1011
  %v1104 = vunpack.c.h.b16 %v1011
  %v1105 = vunpack.c.l.b16 %v1012
  %v1106 = vunpack.c.h.b16 %v1012
  %v1107 = vunpack.c.l.b16 %v1013
  %v1108 = vunpack.c.h.b16 %v1013
  %v1109 = vunpack.c.l.b16 %v1014
  %v1110 = vunpack.c.h.b16 %v1014
  %v1111 = vpack.c.b16 %v1049, %v1047
  %v1112 = vpack.c.b16 %v1050, %v1048
  %v1113 = vpack.c.b16 %v1053, %v1051
  %v1114 = vpack.c.b16 %v1054, %v1052
  %v1115 = vpack.c.b16 %v1057, %v1055
  %v1116 = vpack.c.b16 %v1058, %v1056
  %v1117 = vpack.c.b16 %v1061, %v1059
  %v1118 = vpack.c.b16 %v1062, %v1060
  %v1119 = vpack.c.b16 %v1065, %v1063
  %v1120 = vpack.c.b16 %v1066, %v1064
  %v1121 = vpack.c.b16 %v1069, %v1067
  %v1122 = vpack.c.b16 %v1070, %v1068
  %v1123 = vpack.c.b16 %v1073, %v1071
  %v1124 = vpack.c.b16 %v1074, %v1072
  %v1125 = vpack.c.b16 %v1077, %v1075
  %v1126 = vpack.c.b16 %v1078, %v1076
  %v1127 = vpack.c.b16 %v1081, %v1079
  %v1128 = vpack.c.b16 %v1082, %v1080
  %v1129 = vpack.c.b16 %v1085, %v1083
  %v1130 = vpack.c.b16 %v1086, %v1084
  %v1131 = vpack.c.b16 %v1089, %v1087
  %v1132 = vpack.c.b16 %v1090, %v1088
  %v1133 = vpack.c.b16 %v1093, %v1091
  %v1134 = vpack.c.b16 %v1094, %v1092
  %v1135 = vpack.c.b16 %v1097, %v1095
  %v1136 = vpack.c.b16 %v1098, %v1096
  %v1137 = vpack.c.b16 %v1101, %v1099
  %v1138 = vpack.c.b16 %v1102, %v1100
  %v1139 = vpack.c.b16 %v1105, %v1103
  %v1140 = vpack.c.b16 %v1106, %v1104
  %v1141 = vpack.c.b16 %v1109, %v1107
  %v1142 = vpack.c.b16 %v1110, %v1108
  %1175 = vmatprep.subr.bf16.mxu0 %v1112
  %1176 = vmatpush1.bf16.msra.mxu0 %v1111
  %1177 = vmatprep.subr.bf16.mxu0 %v1114
  %1178 = vmatpush1.bf16.msra.mxu0 %v1113
  %1179 = vmatprep.subr.bf16.mxu0 %v1116
  %1180 = vmatpush1.bf16.msra.mxu0 %v1115
  %1181 = vmatprep.subr.bf16.mxu0 %v1118
  %1182 = vmatpush1.bf16.msra.mxu0 %v1117
  %1183 = vmatprep.subr.bf16.mxu0 %v1120
  %1184 = vmatpush1.bf16.msra.mxu0 %v1119
  %1185 = vmatprep.subr.bf16.mxu0 %v1122
  %1186 = vmatpush1.bf16.msra.mxu0 %v1121
  %1187 = vmatprep.subr.bf16.mxu0 %v1124
  %1188 = vmatpush1.bf16.msra.mxu0 %v1123
  %1189 = vmatprep.subr.bf16.mxu0 %v1126
  %1190 = vmatpush1.bf16.msra.mxu0 %v1125
  %1191 = vmatprep.subr.bf16.mxu0 %v1128
  %1192 = vmatpush1.bf16.msra.mxu0 %v1127
  %1193 = vmatprep.subr.bf16.mxu0 %v1130
  %1194 = vmatpush1.bf16.msra.mxu0 %v1129
  %1195 = vmatprep.subr.bf16.mxu0 %v1132
  %1196 = vmatpush1.bf16.msra.mxu0 %v1131
  %1197 = vmatprep.subr.bf16.mxu0 %v1134
  %1198 = vmatpush1.bf16.msra.mxu0 %v1133
  %1199 = vmatprep.subr.bf16.mxu0 %v1136
  %1200 = vmatpush1.bf16.msra.mxu0 %v1135
  %1201 = vmatprep.subr.bf16.mxu0 %v1138
  %1202 = vmatpush1.bf16.msra.mxu0 %v1137
  %1203 = vmatprep.subr.bf16.mxu0 %v1140
  %1204 = vmatpush1.bf16.msra.mxu0 %v1139
  %1205 = vmatprep.subr.bf16.mxu0 %v1142
  %1206 = vmatpush1.bf16.msra.mxu0 %v1141
  %1207 = vmatprep.mubr.bf16.mxu0 %v158
  %1208 = vmatmul.mubr.bf16.gmra.mrb[0].mxu0 %v157
  %v1209 = vpop.f32.mrb[0].mxu0
  %v1210 = vadd.f32 0.0, %v1209
  %v1211 = vpop.f32.mrb[0].mxu0
  %v1212 = vadd.f32 0.0, %v1211
  %v1213 = vpop.f32.mrb[0].mxu0
  %v1214 = vadd.f32 0.0, %v1213
  %v1215 = vpop.f32.mrb[0].mxu0
  %v1216 = vadd.f32 0.0, %v1215
  %1217 = vmatprep.mubr.bf16.mxu0 %v160
  %1218 = vmatmul.mubr.bf16.gmra.mrb[0].mxu0 %v159
  %v1219 = vpop.f32.mrb[0].mxu0
  %v1220 = vadd.f32 0.0, %v1219
  %v1221 = vpop.f32.mrb[0].mxu0
  %v1222 = vadd.f32 0.0, %v1221
  %v1223 = vpop.f32.mrb[0].mxu0
  %v1224 = vadd.f32 0.0, %v1223
  %v1225 = vpop.f32.mrb[0].mxu0
  %v1226 = vadd.f32 0.0, %v1225
  %1227 = vdwg.mxu0
  %v1228 = vmul.f32 %v149, %v1210
  %v1229 = vmul.f32 %v150, %v1212
  %v1230 = vmul.f32 %v151, %v1214
  %v1231 = vmul.f32 %v152, %v1216
  %v1232 = vmul.f32 %v153, %v1220
  %v1233 = vmul.f32 %v154, %v1222
  %v1234 = vmul.f32 %v155, %v1224
  %v1235 = vmul.f32 %v156, %v1226
  %v1236 = vadd.f32 %v1228, %v1230
  %v1237 = vadd.f32 %v1236, %v1232
  %v1238 = vadd.f32 %v1237, %v1234
  %v1239 = vrot.slane %v1238, 4
  %v1240 = vadd.f32 %v1238, %v1239
  %v1241 = vrot.slane %v1240, 2
  %v1242 = vadd.f32 %v1240, %v1241
  %v1243 = vrot.slane %v1242, 1
  %v1244 = vadd.f32 %v1242, %v1243
  %v1245 = vadd.f32 %v1229, %v1231
  %v1246 = vadd.f32 %v1245, %v1233
  %v1247 = vadd.f32 %v1246, %v1235
  %v1248 = vrot.slane %v1247, 4
  %v1249 = vadd.f32 %v1247, %v1248
  %v1250 = vrot.slane %v1249, 2
  %v1251 = vadd.f32 %v1249, %v1250
  %v1252 = vrot.slane %v1251, 1
  %v1253 = vadd.f32 %v1251, %v1252
  %v1254 = vmul.f32 %v1244, 0.088388346
  %v1255 = vmul.f32 %v1253, 0.088388346
  %s1256 = scalar_lea.vmem %s3, 1024
  %v1257 = vld [vmem:[%s1256] sm:$0xff]
  %v1258 = vld [vmem:[%s1256 + $0x8] sm:$0xff]
  %v1259 = vld [vmem:[%s1256 + $0x10] sm:$0xff]
  %v1260 = vld [vmem:[%s1256 + $0x18] sm:$0xff]
  %v1261 = vld [vmem:[%s1256 + $0x20] sm:$0xff]
  %v1262 = vld [vmem:[%s1256 + $0x28] sm:$0xff]
  %v1263 = vld [vmem:[%s1256 + $0x30] sm:$0xff]
  %v1264 = vld [vmem:[%s1256 + $0x38] sm:$0xff]
  %v1265 = vld [vmem:[%s1256 + $0x40] sm:$0xff]
  %v1266 = vld [vmem:[%s1256 + $0x48] sm:$0xff]
  %v1267 = vld [vmem:[%s1256 + $0x50] sm:$0xff]
  %v1268 = vld [vmem:[%s1256 + $0x58] sm:$0xff]
  %v1269 = vld [vmem:[%s1256 + $0x60] sm:$0xff]
  %v1270 = vld [vmem:[%s1256 + $0x68] sm:$0xff]
  %v1271 = vld [vmem:[%s1256 + $0x70] sm:$0xff]
  %v1272 = vld [vmem:[%s1256 + $0x78] sm:$0xff]
  %v1273 = vld [vmem:[%s1256 + $0x80] sm:$0xff]
  %v1274 = vld [vmem:[%s1256 + $0x88] sm:$0xff]
  %v1275 = vld [vmem:[%s1256 + $0x90] sm:$0xff]
  %v1276 = vld [vmem:[%s1256 + $0x98] sm:$0xff]
  %v1277 = vld [vmem:[%s1256 + $0xa0] sm:$0xff]
  %v1278 = vld [vmem:[%s1256 + $0xa8] sm:$0xff]
  %v1279 = vld [vmem:[%s1256 + $0xb0] sm:$0xff]
  %v1280 = vld [vmem:[%s1256 + $0xb8] sm:$0xff]
  %v1281 = vld [vmem:[%s1256 + $0xc0] sm:$0xff]
  %v1282 = vld [vmem:[%s1256 + $0xc8] sm:$0xff]
  %v1283 = vld [vmem:[%s1256 + $0xd0] sm:$0xff]
  %v1284 = vld [vmem:[%s1256 + $0xd8] sm:$0xff]
  %v1285 = vld [vmem:[%s1256 + $0xe0] sm:$0xff]
  %v1286 = vld [vmem:[%s1256 + $0xe8] sm:$0xff]
  %v1287 = vld [vmem:[%s1256 + $0xf0] sm:$0xff]
  %v1288 = vld [vmem:[%s1256 + $0xf8] sm:$0xff]
  %v1321 = vunpack.c.l.b16 %v1257
  %v1322 = vunpack.c.h.b16 %v1257
  %v1323 = vunpack.c.l.b16 %v1258
  %v1324 = vunpack.c.h.b16 %v1258
  %v1325 = vunpack.c.l.b16 %v1259
  %v1326 = vunpack.c.h.b16 %v1259
  %v1327 = vunpack.c.l.b16 %v1260
  %v1328 = vunpack.c.h.b16 %v1260
  %v1329 = vunpack.c.l.b16 %v1261
  %v1330 = vunpack.c.h.b16 %v1261
  %v1331 = vunpack.c.l.b16 %v1262
  %v1332 = vunpack.c.h.b16 %v1262
  %v1333 = vunpack.c.l.b16 %v1263
  %v1334 = vunpack.c.h.b16 %v1263
  %v1335 = vunpack.c.l.b16 %v1264
  %v1336 = vunpack.c.h.b16 %v1264
  %v1337 = vunpack.c.l.b16 %v1265
  %v1338 = vunpack.c.h.b16 %v1265
  %v1339 = vunpack.c.l.b16 %v1266
  %v1340 = vunpack.c.h.b16 %v1266
  %v1341 = vunpack.c.l.b16 %v1267
  %v1342 = vunpack.c.h.b16 %v1267
  %v1343 = vunpack.c.l.b16 %v1268
  %v1344 = vunpack.c.h.b16 %v1268
  %v1345 = vunpack.c.l.b16 %v1269
  %v1346 = vunpack.c.h.b16 %v1269
  %v1347 = vunpack.c.l.b16 %v1270
  %v1348 = vunpack.c.h.b16 %v1270
  %v1349 = vunpack.c.l.b16 %v1271
  %v1350 = vunpack.c.h.b16 %v1271
  %v1351 = vunpack.c.l.b16 %v1272
  %v1352 = vunpack.c.h.b16 %v1272
  %v1353 = vunpack.c.l.b16 %v1273
  %v1354 = vunpack.c.h.b16 %v1273
  %v1355 = vunpack.c.l.b16 %v1274
  %v1356 = vunpack.c.h.b16 %v1274
  %v1357 = vunpack.c.l.b16 %v1275
  %v1358 = vunpack.c.h.b16 %v1275
  %v1359 = vunpack.c.l.b16 %v1276
  %v1360 = vunpack.c.h.b16 %v1276
  %v1361 = vunpack.c.l.b16 %v1277
  %v1362 = vunpack.c.h.b16 %v1277
  %v1363 = vunpack.c.l.b16 %v1278
  %v1364 = vunpack.c.h.b16 %v1278
  %v1365 = vunpack.c.l.b16 %v1279
  %v1366 = vunpack.c.h.b16 %v1279
  %v1367 = vunpack.c.l.b16 %v1280
  %v1368 = vunpack.c.h.b16 %v1280
  %v1369 = vunpack.c.l.b16 %v1281
  %v1370 = vunpack.c.h.b16 %v1281
  %v1371 = vunpack.c.l.b16 %v1282
  %v1372 = vunpack.c.h.b16 %v1282
  %v1373 = vunpack.c.l.b16 %v1283
  %v1374 = vunpack.c.h.b16 %v1283
  %v1375 = vunpack.c.l.b16 %v1284
  %v1376 = vunpack.c.h.b16 %v1284
  %v1377 = vunpack.c.l.b16 %v1285
  %v1378 = vunpack.c.h.b16 %v1285
  %v1379 = vunpack.c.l.b16 %v1286
  %v1380 = vunpack.c.h.b16 %v1286
  %v1381 = vunpack.c.l.b16 %v1287
  %v1382 = vunpack.c.h.b16 %v1287
  %v1383 = vunpack.c.l.b16 %v1288
  %v1384 = vunpack.c.h.b16 %v1288
  %v1385 = vpack.c.b16 %v1323, %v1321
  %v1386 = vpack.c.b16 %v1324, %v1322
  %v1387 = vpack.c.b16 %v1327, %v1325
  %v1388 = vpack.c.b16 %v1328, %v1326
  %v1389 = vpack.c.b16 %v1331, %v1329
  %v1390 = vpack.c.b16 %v1332, %v1330
  %v1391 = vpack.c.b16 %v1335, %v1333
  %v1392 = vpack.c.b16 %v1336, %v1334
  %v1393 = vpack.c.b16 %v1339, %v1337
  %v1394 = vpack.c.b16 %v1340, %v1338
  %v1395 = vpack.c.b16 %v1343, %v1341
  %v1396 = vpack.c.b16 %v1344, %v1342
  %v1397 = vpack.c.b16 %v1347, %v1345
  %v1398 = vpack.c.b16 %v1348, %v1346
  %v1399 = vpack.c.b16 %v1351, %v1349
  %v1400 = vpack.c.b16 %v1352, %v1350
  %v1401 = vpack.c.b16 %v1355, %v1353
  %v1402 = vpack.c.b16 %v1356, %v1354
  %v1403 = vpack.c.b16 %v1359, %v1357
  %v1404 = vpack.c.b16 %v1360, %v1358
  %v1405 = vpack.c.b16 %v1363, %v1361
  %v1406 = vpack.c.b16 %v1364, %v1362
  %v1407 = vpack.c.b16 %v1367, %v1365
  %v1408 = vpack.c.b16 %v1368, %v1366
  %v1409 = vpack.c.b16 %v1371, %v1369
  %v1410 = vpack.c.b16 %v1372, %v1370
  %v1411 = vpack.c.b16 %v1375, %v1373
  %v1412 = vpack.c.b16 %v1376, %v1374
  %v1413 = vpack.c.b16 %v1379, %v1377
  %v1414 = vpack.c.b16 %v1380, %v1378
  %v1415 = vpack.c.b16 %v1383, %v1381
  %v1416 = vpack.c.b16 %v1384, %v1382
  %1449 = vmatprep.subr.bf16.mxu0 %v1386
  %1450 = vmatpush1.bf16.msra.mxu0 %v1385
  %1451 = vmatprep.subr.bf16.mxu0 %v1388
  %1452 = vmatpush1.bf16.msra.mxu0 %v1387
  %1453 = vmatprep.subr.bf16.mxu0 %v1390
  %1454 = vmatpush1.bf16.msra.mxu0 %v1389
  %1455 = vmatprep.subr.bf16.mxu0 %v1392
  %1456 = vmatpush1.bf16.msra.mxu0 %v1391
  %1457 = vmatprep.subr.bf16.mxu0 %v1394
  %1458 = vmatpush1.bf16.msra.mxu0 %v1393
  %1459 = vmatprep.subr.bf16.mxu0 %v1396
  %1460 = vmatpush1.bf16.msra.mxu0 %v1395
  %1461 = vmatprep.subr.bf16.mxu0 %v1398
  %1462 = vmatpush1.bf16.msra.mxu0 %v1397
  %1463 = vmatprep.subr.bf16.mxu0 %v1400
  %1464 = vmatpush1.bf16.msra.mxu0 %v1399
  %1465 = vmatprep.subr.bf16.mxu0 %v1402
  %1466 = vmatpush1.bf16.msra.mxu0 %v1401
  %1467 = vmatprep.subr.bf16.mxu0 %v1404
  %1468 = vmatpush1.bf16.msra.mxu0 %v1403
  %1469 = vmatprep.subr.bf16.mxu0 %v1406
  %1470 = vmatpush1.bf16.msra.mxu0 %v1405
  %1471 = vmatprep.subr.bf16.mxu0 %v1408
  %1472 = vmatpush1.bf16.msra.mxu0 %v1407
  %1473 = vmatprep.subr.bf16.mxu0 %v1410
  %1474 = vmatpush1.bf16.msra.mxu0 %v1409
  %1475 = vmatprep.subr.bf16.mxu0 %v1412
  %1476 = vmatpush1.bf16.msra.mxu0 %v1411
  %1477 = vmatprep.subr.bf16.mxu0 %v1414
  %1478 = vmatpush1.bf16.msra.mxu0 %v1413
  %1479 = vmatprep.subr.bf16.mxu0 %v1416
  %1480 = vmatpush1.bf16.msra.mxu0 %v1415
  %1481 = vmatprep.mubr.bf16.mxu0 %v158
  %1482 = vmatmul.mubr.bf16.gmra.mrb[0].mxu0 %v157
  %v1483 = vpop.f32.mrb[0].mxu0
  %v1484 = vadd.f32 0.0, %v1483
  %v1485 = vpop.f32.mrb[0].mxu0
  %v1486 = vadd.f32 0.0, %v1485
  %v1487 = vpop.f32.mrb[0].mxu0
  %v1488 = vadd.f32 0.0, %v1487
  %v1489 = vpop.f32.mrb[0].mxu0
  %v1490 = vadd.f32 0.0, %v1489
  %1491 = vmatprep.mubr.bf16.mxu0 %v160
  %1492 = vmatmul.mubr.bf16.gmra.mrb[0].mxu0 %v159
  %v1493 = vpop.f32.mrb[0].mxu0
  %v1494 = vadd.f32 0.0, %v1493
  %v1495 = vpop.f32.mrb[0].mxu0
  %v1496 = vadd.f32 0.0, %v1495
  %v1497 = vpop.f32.mrb[0].mxu0
  %v1498 = vadd.f32 0.0, %v1497
  %v1499 = vpop.f32.mrb[0].mxu0
  %v1500 = vadd.f32 0.0, %v1499
  %1501 = vdwg.mxu0
  %v1502 = vmul.f32 %v149, %v1484
  %v1503 = vmul.f32 %v150, %v1486
  %v1504 = vmul.f32 %v151, %v1488
  %v1505 = vmul.f32 %v152, %v1490
  %v1506 = vmul.f32 %v153, %v1494
  %v1507 = vmul.f32 %v154, %v1496
  %v1508 = vmul.f32 %v155, %v1498
  %v1509 = vmul.f32 %v156, %v1500
  %v1510 = vadd.f32 %v1502, %v1504
  %v1511 = vadd.f32 %v1510, %v1506
  %v1512 = vadd.f32 %v1511, %v1508
  %v1513 = vrot.slane %v1512, 4
  %v1514 = vadd.f32 %v1512, %v1513
  %v1515 = vrot.slane %v1514, 2
  %v1516 = vadd.f32 %v1514, %v1515
  %v1517 = vrot.slane %v1516, 1
  %v1518 = vadd.f32 %v1516, %v1517
  %v1519 = vadd.f32 %v1503, %v1505
  %v1520 = vadd.f32 %v1519, %v1507
  %v1521 = vadd.f32 %v1520, %v1509
  %v1522 = vrot.slane %v1521, 4
  %v1523 = vadd.f32 %v1521, %v1522
  %v1524 = vrot.slane %v1523, 2
  %v1525 = vadd.f32 %v1523, %v1524
  %v1526 = vrot.slane %v1525, 1
  %v1527 = vadd.f32 %v1525, %v1526
  %v1528 = vmul.f32 %v1518, 0.088388346
  %v1529 = vmul.f32 %v1527, 0.088388346
  %s1530 = scalar_lea.vmem %s3, 1280
  %v1531 = vld [vmem:[%s1530] sm:$0xff]
  %v1532 = vld [vmem:[%s1530 + $0x8] sm:$0xff]
  %v1533 = vld [vmem:[%s1530 + $0x10] sm:$0xff]
  %v1534 = vld [vmem:[%s1530 + $0x18] sm:$0xff]
  %v1535 = vld [vmem:[%s1530 + $0x20] sm:$0xff]
  %v1536 = vld [vmem:[%s1530 + $0x28] sm:$0xff]
  %v1537 = vld [vmem:[%s1530 + $0x30] sm:$0xff]
  %v1538 = vld [vmem:[%s1530 + $0x38] sm:$0xff]
  %v1539 = vld [vmem:[%s1530 + $0x40] sm:$0xff]
  %v1540 = vld [vmem:[%s1530 + $0x48] sm:$0xff]
  %v1541 = vld [vmem:[%s1530 + $0x50] sm:$0xff]
  %v1542 = vld [vmem:[%s1530 + $0x58] sm:$0xff]
  %v1543 = vld [vmem:[%s1530 + $0x60] sm:$0xff]
  %v1544 = vld [vmem:[%s1530 + $0x68] sm:$0xff]
  %v1545 = vld [vmem:[%s1530 + $0x70] sm:$0xff]
  %v1546 = vld [vmem:[%s1530 + $0x78] sm:$0xff]
  %v1547 = vld [vmem:[%s1530 + $0x80] sm:$0xff]
  %v1548 = vld [vmem:[%s1530 + $0x88] sm:$0xff]
  %v1549 = vld [vmem:[%s1530 + $0x90] sm:$0xff]
  %v1550 = vld [vmem:[%s1530 + $0x98] sm:$0xff]
  %v1551 = vld [vmem:[%s1530 + $0xa0] sm:$0xff]
  %v1552 = vld [vmem:[%s1530 + $0xa8] sm:$0xff]
  %v1553 = vld [vmem:[%s1530 + $0xb0] sm:$0xff]
  %v1554 = vld [vmem:[%s1530 + $0xb8] sm:$0xff]
  %v1555 = vld [vmem:[%s1530 + $0xc0] sm:$0xff]
  %v1556 = vld [vmem:[%s1530 + $0xc8] sm:$0xff]
  %v1557 = vld [vmem:[%s1530 + $0xd0] sm:$0xff]
  %v1558 = vld [vmem:[%s1530 + $0xd8] sm:$0xff]
  %v1559 = vld [vmem:[%s1530 + $0xe0] sm:$0xff]
  %v1560 = vld [vmem:[%s1530 + $0xe8] sm:$0xff]
  %v1561 = vld [vmem:[%s1530 + $0xf0] sm:$0xff]
  %v1562 = vld [vmem:[%s1530 + $0xf8] sm:$0xff]
  %v1595 = vunpack.c.l.b16 %v1531
  %v1596 = vunpack.c.h.b16 %v1531
  %v1597 = vunpack.c.l.b16 %v1532
  %v1598 = vunpack.c.h.b16 %v1532
  %v1599 = vunpack.c.l.b16 %v1533
  %v1600 = vunpack.c.h.b16 %v1533
  %v1601 = vunpack.c.l.b16 %v1534
  %v1602 = vunpack.c.h.b16 %v1534
  %v1603 = vunpack.c.l.b16 %v1535
  %v1604 = vunpack.c.h.b16 %v1535
  %v1605 = vunpack.c.l.b16 %v1536
  %v1606 = vunpack.c.h.b16 %v1536
  %v1607 = vunpack.c.l.b16 %v1537
  %v1608 = vunpack.c.h.b16 %v1537
  %v1609 = vunpack.c.l.b16 %v1538
  %v1610 = vunpack.c.h.b16 %v1538
  %v1611 = vunpack.c.l.b16 %v1539
  %v1612 = vunpack.c.h.b16 %v1539
  %v1613 = vunpack.c.l.b16 %v1540
  %v1614 = vunpack.c.h.b16 %v1540
  %v1615 = vunpack.c.l.b16 %v1541
  %v1616 = vunpack.c.h.b16 %v1541
  %v1617 = vunpack.c.l.b16 %v1542
  %v1618 = vunpack.c.h.b16 %v1542
  %v1619 = vunpack.c.l.b16 %v1543
  %v1620 = vunpack.c.h.b16 %v1543
  %v1621 = vunpack.c.l.b16 %v1544
  %v1622 = vunpack.c.h.b16 %v1544
  %v1623 = vunpack.c.l.b16 %v1545
  %v1624 = vunpack.c.h.b16 %v1545
  %v1625 = vunpack.c.l.b16 %v1546
  %v1626 = vunpack.c.h.b16 %v1546
  %v1627 = vunpack.c.l.b16 %v1547
  %v1628 = vunpack.c.h.b16 %v1547
  %v1629 = vunpack.c.l.b16 %v1548
  %v1630 = vunpack.c.h.b16 %v1548
  %v1631 = vunpack.c.l.b16 %v1549
  %v1632 = vunpack.c.h.b16 %v1549
  %v1633 = vunpack.c.l.b16 %v1550
  %v1634 = vunpack.c.h.b16 %v1550
  %v1635 = vunpack.c.l.b16 %v1551
  %v1636 = vunpack.c.h.b16 %v1551
  %v1637 = vunpack.c.l.b16 %v1552
  %v1638 = vunpack.c.h.b16 %v1552
  %v1639 = vunpack.c.l.b16 %v1553
  %v1640 = vunpack.c.h.b16 %v1553
  %v1641 = vunpack.c.l.b16 %v1554
  %v1642 = vunpack.c.h.b16 %v1554
  %v1643 = vunpack.c.l.b16 %v1555
  %v1644 = vunpack.c.h.b16 %v1555
  %v1645 = vunpack.c.l.b16 %v1556
  %v1646 = vunpack.c.h.b16 %v1556
  %v1647 = vunpack.c.l.b16 %v1557
  %v1648 = vunpack.c.h.b16 %v1557
  %v1649 = vunpack.c.l.b16 %v1558
  %v1650 = vunpack.c.h.b16 %v1558
  %v1651 = vunpack.c.l.b16 %v1559
  %v1652 = vunpack.c.h.b16 %v1559
  %v1653 = vunpack.c.l.b16 %v1560
  %v1654 = vunpack.c.h.b16 %v1560
  %v1655 = vunpack.c.l.b16 %v1561
  %v1656 = vunpack.c.h.b16 %v1561
  %v1657 = vunpack.c.l.b16 %v1562
  %v1658 = vunpack.c.h.b16 %v1562
  %v1659 = vpack.c.b16 %v1597, %v1595
  %v1660 = vpack.c.b16 %v1598, %v1596
  %v1661 = vpack.c.b16 %v1601, %v1599
  %v1662 = vpack.c.b16 %v1602, %v1600
  %v1663 = vpack.c.b16 %v1605, %v1603
  %v1664 = vpack.c.b16 %v1606, %v1604
  %v1665 = vpack.c.b16 %v1609, %v1607
  %v1666 = vpack.c.b16 %v1610, %v1608
  %v1667 = vpack.c.b16 %v1613, %v1611
  %v1668 = vpack.c.b16 %v1614, %v1612
  %v1669 = vpack.c.b16 %v1617, %v1615
  %v1670 = vpack.c.b16 %v1618, %v1616
  %v1671 = vpack.c.b16 %v1621, %v1619
  %v1672 = vpack.c.b16 %v1622, %v1620
  %v1673 = vpack.c.b16 %v1625, %v1623
  %v1674 = vpack.c.b16 %v1626, %v1624
  %v1675 = vpack.c.b16 %v1629, %v1627
  %v1676 = vpack.c.b16 %v1630, %v1628
  %v1677 = vpack.c.b16 %v1633, %v1631
  %v1678 = vpack.c.b16 %v1634, %v1632
  %v1679 = vpack.c.b16 %v1637, %v1635
  %v1680 = vpack.c.b16 %v1638, %v1636
  %v1681 = vpack.c.b16 %v1641, %v1639
  %v1682 = vpack.c.b16 %v1642, %v1640
  %v1683 = vpack.c.b16 %v1645, %v1643
  %v1684 = vpack.c.b16 %v1646, %v1644
  %v1685 = vpack.c.b16 %v1649, %v1647
  %v1686 = vpack.c.b16 %v1650, %v1648
  %v1687 = vpack.c.b16 %v1653, %v1651
  %v1688 = vpack.c.b16 %v1654, %v1652
  %v1689 = vpack.c.b16 %v1657, %v1655
  %v1690 = vpack.c.b16 %v1658, %v1656
  %1723 = vmatprep.subr.bf16.mxu0 %v1660
  %1724 = vmatpush1.bf16.msra.mxu0 %v1659
  %1725 = vmatprep.subr.bf16.mxu0 %v1662
  %1726 = vmatpush1.bf16.msra.mxu0 %v1661
  %1727 = vmatprep.subr.bf16.mxu0 %v1664
  %1728 = vmatpush1.bf16.msra.mxu0 %v1663
  %1729 = vmatprep.subr.bf16.mxu0 %v1666
  %1730 = vmatpush1.bf16.msra.mxu0 %v1665
  %1731 = vmatprep.subr.bf16.mxu0 %v1668
  %1732 = vmatpush1.bf16.msra.mxu0 %v1667
  %1733 = vmatprep.subr.bf16.mxu0 %v1670
  %1734 = vmatpush1.bf16.msra.mxu0 %v1669
  %1735 = vmatprep.subr.bf16.mxu0 %v1672
  %1736 = vmatpush1.bf16.msra.mxu0 %v1671
  %1737 = vmatprep.subr.bf16.mxu0 %v1674
  %1738 = vmatpush1.bf16.msra.mxu0 %v1673
  %1739 = vmatprep.subr.bf16.mxu0 %v1676
  %1740 = vmatpush1.bf16.msra.mxu0 %v1675
  %1741 = vmatprep.subr.bf16.mxu0 %v1678
  %1742 = vmatpush1.bf16.msra.mxu0 %v1677
  %1743 = vmatprep.subr.bf16.mxu0 %v1680
  %1744 = vmatpush1.bf16.msra.mxu0 %v1679
  %1745 = vmatprep.subr.bf16.mxu0 %v1682
  %1746 = vmatpush1.bf16.msra.mxu0 %v1681
  %1747 = vmatprep.subr.bf16.mxu0 %v1684
  %1748 = vmatpush1.bf16.msra.mxu0 %v1683
  %1749 = vmatprep.subr.bf16.mxu0 %v1686
  %1750 = vmatpush1.bf16.msra.mxu0 %v1685
  %1751 = vmatprep.subr.bf16.mxu0 %v1688
  %1752 = vmatpush1.bf16.msra.mxu0 %v1687
  %1753 = vmatprep.subr.bf16.mxu0 %v1690
  %1754 = vmatpush1.bf16.msra.mxu0 %v1689
  %1755 = vmatprep.mubr.bf16.mxu0 %v158
  %1756 = vmatmul.mubr.bf16.gmra.mrb[0].mxu0 %v157
  %v1757 = vpop.f32.mrb[0].mxu0
  %v1758 = vadd.f32 0.0, %v1757
  %v1759 = vpop.f32.mrb[0].mxu0
  %v1760 = vadd.f32 0.0, %v1759
  %v1761 = vpop.f32.mrb[0].mxu0
  %v1762 = vadd.f32 0.0, %v1761
  %v1763 = vpop.f32.mrb[0].mxu0
  %v1764 = vadd.f32 0.0, %v1763
  %1765 = vmatprep.mubr.bf16.mxu0 %v160
  %1766 = vmatmul.mubr.bf16.gmra.mrb[0].mxu0 %v159
  %v1767 = vpop.f32.mrb[0].mxu0
  %v1768 = vadd.f32 0.0, %v1767
  %v1769 = vpop.f32.mrb[0].mxu0
  %v1770 = vadd.f32 0.0, %v1769
  %v1771 = vpop.f32.mrb[0].mxu0
  %v1772 = vadd.f32 0.0, %v1771
  %v1773 = vpop.f32.mrb[0].mxu0
  %v1774 = vadd.f32 0.0, %v1773
  %1775 = vdwg.mxu0
  %v1776 = vmul.f32 %v149, %v1758
  %v1777 = vmul.f32 %v150, %v1760
  %v1778 = vmul.f32 %v151, %v1762
  %v1779 = vmul.f32 %v152, %v1764
  %v1780 = vmul.f32 %v153, %v1768
  %v1781 = vmul.f32 %v154, %v1770
  %v1782 = vmul.f32 %v155, %v1772
  %v1783 = vmul.f32 %v156, %v1774
  %v1784 = vadd.f32 %v1776, %v1778
  %v1785 = vadd.f32 %v1784, %v1780
  %v1786 = vadd.f32 %v1785, %v1782
  %v1787 = vrot.slane %v1786, 4
  %v1788 = vadd.f32 %v1786, %v1787
  %v1789 = vrot.slane %v1788, 2
  %v1790 = vadd.f32 %v1788, %v1789
  %v1791 = vrot.slane %v1790, 1
  %v1792 = vadd.f32 %v1790, %v1791
  %v1793 = vadd.f32 %v1777, %v1779
  %v1794 = vadd.f32 %v1793, %v1781
  %v1795 = vadd.f32 %v1794, %v1783
  %v1796 = vrot.slane %v1795, 4
  %v1797 = vadd.f32 %v1795, %v1796
  %v1798 = vrot.slane %v1797, 2
  %v1799 = vadd.f32 %v1797, %v1798
  %v1800 = vrot.slane %v1799, 1
  %v1801 = vadd.f32 %v1799, %v1800
  %v1802 = vmul.f32 %v1792, 0.088388346
  %v1803 = vmul.f32 %v1801, 0.088388346
  %s1804 = scalar_lea.vmem %s3, 1536
  %v1805 = vld [vmem:[%s1804] sm:$0xff]
  %v1806 = vld [vmem:[%s1804 + $0x8] sm:$0xff]
  %v1807 = vld [vmem:[%s1804 + $0x10] sm:$0xff]
  %v1808 = vld [vmem:[%s1804 + $0x18] sm:$0xff]
  %v1809 = vld [vmem:[%s1804 + $0x20] sm:$0xff]
  %v1810 = vld [vmem:[%s1804 + $0x28] sm:$0xff]
  %v1811 = vld [vmem:[%s1804 + $0x30] sm:$0xff]
  %v1812 = vld [vmem:[%s1804 + $0x38] sm:$0xff]
  %v1813 = vld [vmem:[%s1804 + $0x40] sm:$0xff]
  %v1814 = vld [vmem:[%s1804 + $0x48] sm:$0xff]
  %v1815 = vld [vmem:[%s1804 + $0x50] sm:$0xff]
  %v1816 = vld [vmem:[%s1804 + $0x58] sm:$0xff]
  %v1817 = vld [vmem:[%s1804 + $0x60] sm:$0xff]
  %v1818 = vld [vmem:[%s1804 + $0x68] sm:$0xff]
  %v1819 = vld [vmem:[%s1804 + $0x70] sm:$0xff]
  %v1820 = vld [vmem:[%s1804 + $0x78] sm:$0xff]
  %v1821 = vld [vmem:[%s1804 + $0x80] sm:$0xff]
  %v1822 = vld [vmem:[%s1804 + $0x88] sm:$0xff]
  %v1823 = vld [vmem:[%s1804 + $0x90] sm:$0xff]
  %v1824 = vld [vmem:[%s1804 + $0x98] sm:$0xff]
  %v1825 = vld [vmem:[%s1804 + $0xa0] sm:$0xff]
  %v1826 = vld [vmem:[%s1804 + $0xa8] sm:$0xff]
  %v1827 = vld [vmem:[%s1804 + $0xb0] sm:$0xff]
  %v1828 = vld [vmem:[%s1804 + $0xb8] sm:$0xff]
  %v1829 = vld [vmem:[%s1804 + $0xc0] sm:$0xff]
  %v1830 = vld [vmem:[%s1804 + $0xc8] sm:$0xff]
  %v1831 = vld [vmem:[%s1804 + $0xd0] sm:$0xff]
  %v1832 = vld [vmem:[%s1804 + $0xd8] sm:$0xff]
  %v1833 = vld [vmem:[%s1804 + $0xe0] sm:$0xff]
  %v1834 = vld [vmem:[%s1804 + $0xe8] sm:$0xff]
  %v1835 = vld [vmem:[%s1804 + $0xf0] sm:$0xff]
  %v1836 = vld [vmem:[%s1804 + $0xf8] sm:$0xff]
  %v1869 = vunpack.c.l.b16 %v1805
  %v1870 = vunpack.c.h.b16 %v1805
  %v1871 = vunpack.c.l.b16 %v1806
  %v1872 = vunpack.c.h.b16 %v1806
  %v1873 = vunpack.c.l.b16 %v1807
  %v1874 = vunpack.c.h.b16 %v1807
  %v1875 = vunpack.c.l.b16 %v1808
  %v1876 = vunpack.c.h.b16 %v1808
  %v1877 = vunpack.c.l.b16 %v1809
  %v1878 = vunpack.c.h.b16 %v1809
  %v1879 = vunpack.c.l.b16 %v1810
  %v1880 = vunpack.c.h.b16 %v1810
  %v1881 = vunpack.c.l.b16 %v1811
  %v1882 = vunpack.c.h.b16 %v1811
  %v1883 = vunpack.c.l.b16 %v1812
  %v1884 = vunpack.c.h.b16 %v1812
  %v1885 = vunpack.c.l.b16 %v1813
  %v1886 = vunpack.c.h.b16 %v1813
  %v1887 = vunpack.c.l.b16 %v1814
  %v1888 = vunpack.c.h.b16 %v1814
  %v1889 = vunpack.c.l.b16 %v1815
  %v1890 = vunpack.c.h.b16 %v1815
  %v1891 = vunpack.c.l.b16 %v1816
  %v1892 = vunpack.c.h.b16 %v1816
  %v1893 = vunpack.c.l.b16 %v1817
  %v1894 = vunpack.c.h.b16 %v1817
  %v1895 = vunpack.c.l.b16 %v1818
  %v1896 = vunpack.c.h.b16 %v1818
  %v1897 = vunpack.c.l.b16 %v1819
  %v1898 = vunpack.c.h.b16 %v1819
  %v1899 = vunpack.c.l.b16 %v1820
  %v1900 = vunpack.c.h.b16 %v1820
  %v1901 = vunpack.c.l.b16 %v1821
  %v1902 = vunpack.c.h.b16 %v1821
  %v1903 = vunpack.c.l.b16 %v1822
  %v1904 = vunpack.c.h.b16 %v1822
  %v1905 = vunpack.c.l.b16 %v1823
  %v1906 = vunpack.c.h.b16 %v1823
  %v1907 = vunpack.c.l.b16 %v1824
  %v1908 = vunpack.c.h.b16 %v1824
  %v1909 = vunpack.c.l.b16 %v1825
  %v1910 = vunpack.c.h.b16 %v1825
  %v1911 = vunpack.c.l.b16 %v1826
  %v1912 = vunpack.c.h.b16 %v1826
  %v1913 = vunpack.c.l.b16 %v1827
  %v1914 = vunpack.c.h.b16 %v1827
  %v1915 = vunpack.c.l.b16 %v1828
  %v1916 = vunpack.c.h.b16 %v1828
  %v1917 = vunpack.c.l.b16 %v1829
  %v1918 = vunpack.c.h.b16 %v1829
  %v1919 = vunpack.c.l.b16 %v1830
  %v1920 = vunpack.c.h.b16 %v1830
  %v1921 = vunpack.c.l.b16 %v1831
  %v1922 = vunpack.c.h.b16 %v1831
  %v1923 = vunpack.c.l.b16 %v1832
  %v1924 = vunpack.c.h.b16 %v1832
  %v1925 = vunpack.c.l.b16 %v1833
  %v1926 = vunpack.c.h.b16 %v1833
  %v1927 = vunpack.c.l.b16 %v1834
  %v1928 = vunpack.c.h.b16 %v1834
  %v1929 = vunpack.c.l.b16 %v1835
  %v1930 = vunpack.c.h.b16 %v1835
  %v1931 = vunpack.c.l.b16 %v1836
  %v1932 = vunpack.c.h.b16 %v1836
  %v1933 = vpack.c.b16 %v1871, %v1869
  %v1934 = vpack.c.b16 %v1872, %v1870
  %v1935 = vpack.c.b16 %v1875, %v1873
  %v1936 = vpack.c.b16 %v1876, %v1874
  %v1937 = vpack.c.b16 %v1879, %v1877
  %v1938 = vpack.c.b16 %v1880, %v1878
  %v1939 = vpack.c.b16 %v1883, %v1881
  %v1940 = vpack.c.b16 %v1884, %v1882
  %v1941 = vpack.c.b16 %v1887, %v1885
  %v1942 = vpack.c.b16 %v1888, %v1886
  %v1943 = vpack.c.b16 %v1891, %v1889
  %v1944 = vpack.c.b16 %v1892, %v1890
  %v1945 = vpack.c.b16 %v1895, %v1893
  %v1946 = vpack.c.b16 %v1896, %v1894
  %v1947 = vpack.c.b16 %v1899, %v1897
  %v1948 = vpack.c.b16 %v1900, %v1898
  %v1949 = vpack.c.b16 %v1903, %v1901
  %v1950 = vpack.c.b16 %v1904, %v1902
  %v1951 = vpack.c.b16 %v1907, %v1905
  %v1952 = vpack.c.b16 %v1908, %v1906
  %v1953 = vpack.c.b16 %v1911, %v1909
  %v1954 = vpack.c.b16 %v1912, %v1910
  %v1955 = vpack.c.b16 %v1915, %v1913
  %v1956 = vpack.c.b16 %v1916, %v1914
  %v1957 = vpack.c.b16 %v1919, %v1917
  %v1958 = vpack.c.b16 %v1920, %v1918
  %v1959 = vpack.c.b16 %v1923, %v1921
  %v1960 = vpack.c.b16 %v1924, %v1922
  %v1961 = vpack.c.b16 %v1927, %v1925
  %v1962 = vpack.c.b16 %v1928, %v1926
  %v1963 = vpack.c.b16 %v1931, %v1929
  %v1964 = vpack.c.b16 %v1932, %v1930
  %1997 = vmatprep.subr.bf16.mxu0 %v1934
  %1998 = vmatpush1.bf16.msra.mxu0 %v1933
  %1999 = vmatprep.subr.bf16.mxu0 %v1936
  %2000 = vmatpush1.bf16.msra.mxu0 %v1935
  %2001 = vmatprep.subr.bf16.mxu0 %v1938
  %2002 = vmatpush1.bf16.msra.mxu0 %v1937
  %2003 = vmatprep.subr.bf16.mxu0 %v1940
  %2004 = vmatpush1.bf16.msra.mxu0 %v1939
  %2005 = vmatprep.subr.bf16.mxu0 %v1942
  %2006 = vmatpush1.bf16.msra.mxu0 %v1941
  %2007 = vmatprep.subr.bf16.mxu0 %v1944
  %2008 = vmatpush1.bf16.msra.mxu0 %v1943
  %2009 = vmatprep.subr.bf16.mxu0 %v1946
  %2010 = vmatpush1.bf16.msra.mxu0 %v1945
  %2011 = vmatprep.subr.bf16.mxu0 %v1948
  %2012 = vmatpush1.bf16.msra.mxu0 %v1947
  %2013 = vmatprep.subr.bf16.mxu0 %v1950
  %2014 = vmatpush1.bf16.msra.mxu0 %v1949
  %2015 = vmatprep.subr.bf16.mxu0 %v1952
  %2016 = vmatpush1.bf16.msra.mxu0 %v1951
  %2017 = vmatprep.subr.bf16.mxu0 %v1954
  %2018 = vmatpush1.bf16.msra.mxu0 %v1953
  %2019 = vmatprep.subr.bf16.mxu0 %v1956
  %2020 = vmatpush1.bf16.msra.mxu0 %v1955
  %2021 = vmatprep.subr.bf16.mxu0 %v1958
  %2022 = vmatpush1.bf16.msra.mxu0 %v1957
  %2023 = vmatprep.subr.bf16.mxu0 %v1960
  %2024 = vmatpush1.bf16.msra.mxu0 %v1959
  %2025 = vmatprep.subr.bf16.mxu0 %v1962
  %2026 = vmatpush1.bf16.msra.mxu0 %v1961
  %2027 = vmatprep.subr.bf16.mxu0 %v1964
  %2028 = vmatpush1.bf16.msra.mxu0 %v1963
  %2029 = vmatprep.mubr.bf16.mxu0 %v158
  %2030 = vmatmul.mubr.bf16.gmra.mrb[0].mxu0 %v157
  %v2031 = vpop.f32.mrb[0].mxu0
  %v2032 = vadd.f32 0.0, %v2031
  %v2033 = vpop.f32.mrb[0].mxu0
  %v2034 = vadd.f32 0.0, %v2033
  %v2035 = vpop.f32.mrb[0].mxu0
  %v2036 = vadd.f32 0.0, %v2035
  %v2037 = vpop.f32.mrb[0].mxu0
  %v2038 = vadd.f32 0.0, %v2037
  %2039 = vmatprep.mubr.bf16.mxu0 %v160
  %2040 = vmatmul.mubr.bf16.gmra.mrb[0].mxu0 %v159
  %v2041 = vpop.f32.mrb[0].mxu0
  %v2042 = vadd.f32 0.0, %v2041
  %v2043 = vpop.f32.mrb[0].mxu0
  %v2044 = vadd.f32 0.0, %v2043
  %v2045 = vpop.f32.mrb[0].mxu0
  %v2046 = vadd.f32 0.0, %v2045
  %v2047 = vpop.f32.mrb[0].mxu0
  %v2048 = vadd.f32 0.0, %v2047
  %2049 = vdwg.mxu0
  %v2050 = vmul.f32 %v149, %v2032
  %v2051 = vmul.f32 %v150, %v2034
  %v2052 = vmul.f32 %v151, %v2036
  %v2053 = vmul.f32 %v152, %v2038
  %v2054 = vmul.f32 %v153, %v2042
  %v2055 = vmul.f32 %v154, %v2044
  %v2056 = vmul.f32 %v155, %v2046
  %v2057 = vmul.f32 %v156, %v2048
  %v2058 = vadd.f32 %v2050, %v2052
  %v2059 = vadd.f32 %v2058, %v2054
  %v2060 = vadd.f32 %v2059, %v2056
  %v2061 = vrot.slane %v2060, 4
  %v2062 = vadd.f32 %v2060, %v2061
  %v2063 = vrot.slane %v2062, 2
  %v2064 = vadd.f32 %v2062, %v2063
  %v2065 = vrot.slane %v2064, 1
  %v2066 = vadd.f32 %v2064, %v2065
  %v2067 = vadd.f32 %v2051, %v2053
  %v2068 = vadd.f32 %v2067, %v2055
  %v2069 = vadd.f32 %v2068, %v2057
  %v2070 = vrot.slane %v2069, 4
  %v2071 = vadd.f32 %v2069, %v2070
  %v2072 = vrot.slane %v2071, 2
  %v2073 = vadd.f32 %v2071, %v2072
  %v2074 = vrot.slane %v2073, 1
  %v2075 = vadd.f32 %v2073, %v2074
  %v2076 = vmul.f32 %v2066, 0.088388346
  %v2077 = vmul.f32 %v2075, 0.088388346
  %s2078 = scalar_lea.vmem %s3, 1792
  %v2079 = vld [vmem:[%s2078] sm:$0xff]
  %v2080 = vld [vmem:[%s2078 + $0x8] sm:$0xff]
  %v2081 = vld [vmem:[%s2078 + $0x10] sm:$0xff]
  %v2082 = vld [vmem:[%s2078 + $0x18] sm:$0xff]
  %v2083 = vld [vmem:[%s2078 + $0x20] sm:$0xff]
  %v2084 = vld [vmem:[%s2078 + $0x28] sm:$0xff]
  %v2085 = vld [vmem:[%s2078 + $0x30] sm:$0xff]
  %v2086 = vld [vmem:[%s2078 + $0x38] sm:$0xff]
  %v2087 = vld [vmem:[%s2078 + $0x40] sm:$0xff]
  %v2088 = vld [vmem:[%s2078 + $0x48] sm:$0xff]
  %v2089 = vld [vmem:[%s2078 + $0x50] sm:$0xff]
  %v2090 = vld [vmem:[%s2078 + $0x58] sm:$0xff]
  %v2091 = vld [vmem:[%s2078 + $0x60] sm:$0xff]
  %v2092 = vld [vmem:[%s2078 + $0x68] sm:$0xff]
  %v2093 = vld [vmem:[%s2078 + $0x70] sm:$0xff]
  %v2094 = vld [vmem:[%s2078 + $0x78] sm:$0xff]
  %v2095 = vld [vmem:[%s2078 + $0x80] sm:$0xff]
  %v2096 = vld [vmem:[%s2078 + $0x88] sm:$0xff]
  %v2097 = vld [vmem:[%s2078 + $0x90] sm:$0xff]
  %v2098 = vld [vmem:[%s2078 + $0x98] sm:$0xff]
  %v2099 = vld [vmem:[%s2078 + $0xa0] sm:$0xff]
  %v2100 = vld [vmem:[%s2078 + $0xa8] sm:$0xff]
  %v2101 = vld [vmem:[%s2078 + $0xb0] sm:$0xff]
  %v2102 = vld [vmem:[%s2078 + $0xb8] sm:$0xff]
  %v2103 = vld [vmem:[%s2078 + $0xc0] sm:$0xff]
  %v2104 = vld [vmem:[%s2078 + $0xc8] sm:$0xff]
  %v2105 = vld [vmem:[%s2078 + $0xd0] sm:$0xff]
  %v2106 = vld [vmem:[%s2078 + $0xd8] sm:$0xff]
  %v2107 = vld [vmem:[%s2078 + $0xe0] sm:$0xff]
  %v2108 = vld [vmem:[%s2078 + $0xe8] sm:$0xff]
  %v2109 = vld [vmem:[%s2078 + $0xf0] sm:$0xff]
  %v2110 = vld [vmem:[%s2078 + $0xf8] sm:$0xff]
  %v2143 = vunpack.c.l.b16 %v2079
  %v2144 = vunpack.c.h.b16 %v2079
  %v2145 = vunpack.c.l.b16 %v2080
  %v2146 = vunpack.c.h.b16 %v2080
  %v2147 = vunpack.c.l.b16 %v2081
  %v2148 = vunpack.c.h.b16 %v2081
  %v2149 = vunpack.c.l.b16 %v2082
  %v2150 = vunpack.c.h.b16 %v2082
  %v2151 = vunpack.c.l.b16 %v2083
  %v2152 = vunpack.c.h.b16 %v2083
  %v2153 = vunpack.c.l.b16 %v2084
  %v2154 = vunpack.c.h.b16 %v2084
  %v2155 = vunpack.c.l.b16 %v2085
  %v2156 = vunpack.c.h.b16 %v2085
  %v2157 = vunpack.c.l.b16 %v2086
  %v2158 = vunpack.c.h.b16 %v2086
  %v2159 = vunpack.c.l.b16 %v2087
  %v2160 = vunpack.c.h.b16 %v2087
  %v2161 = vunpack.c.l.b16 %v2088
  %v2162 = vunpack.c.h.b16 %v2088
  %v2163 = vunpack.c.l.b16 %v2089
  %v2164 = vunpack.c.h.b16 %v2089
  %v2165 = vunpack.c.l.b16 %v2090
  %v2166 = vunpack.c.h.b16 %v2090
  %v2167 = vunpack.c.l.b16 %v2091
  %v2168 = vunpack.c.h.b16 %v2091
  %v2169 = vunpack.c.l.b16 %v2092
  %v2170 = vunpack.c.h.b16 %v2092
  %v2171 = vunpack.c.l.b16 %v2093
  %v2172 = vunpack.c.h.b16 %v2093
  %v2173 = vunpack.c.l.b16 %v2094
  %v2174 = vunpack.c.h.b16 %v2094
  %v2175 = vunpack.c.l.b16 %v2095
  %v2176 = vunpack.c.h.b16 %v2095
  %v2177 = vunpack.c.l.b16 %v2096
  %v2178 = vunpack.c.h.b16 %v2096
  %v2179 = vunpack.c.l.b16 %v2097
  %v2180 = vunpack.c.h.b16 %v2097
  %v2181 = vunpack.c.l.b16 %v2098
  %v2182 = vunpack.c.h.b16 %v2098
  %v2183 = vunpack.c.l.b16 %v2099
  %v2184 = vunpack.c.h.b16 %v2099
  %v2185 = vunpack.c.l.b16 %v2100
  %v2186 = vunpack.c.h.b16 %v2100
  %v2187 = vunpack.c.l.b16 %v2101
  %v2188 = vunpack.c.h.b16 %v2101
  %v2189 = vunpack.c.l.b16 %v2102
  %v2190 = vunpack.c.h.b16 %v2102
  %v2191 = vunpack.c.l.b16 %v2103
  %v2192 = vunpack.c.h.b16 %v2103
  %v2193 = vunpack.c.l.b16 %v2104
  %v2194 = vunpack.c.h.b16 %v2104
  %v2195 = vunpack.c.l.b16 %v2105
  %v2196 = vunpack.c.h.b16 %v2105
  %v2197 = vunpack.c.l.b16 %v2106
  %v2198 = vunpack.c.h.b16 %v2106
  %v2199 = vunpack.c.l.b16 %v2107
  %v2200 = vunpack.c.h.b16 %v2107
  %v2201 = vunpack.c.l.b16 %v2108
  %v2202 = vunpack.c.h.b16 %v2108
  %v2203 = vunpack.c.l.b16 %v2109
  %v2204 = vunpack.c.h.b16 %v2109
  %v2205 = vunpack.c.l.b16 %v2110
  %v2206 = vunpack.c.h.b16 %v2110
  %v2207 = vpack.c.b16 %v2145, %v2143
  %v2208 = vpack.c.b16 %v2146, %v2144
  %v2209 = vpack.c.b16 %v2149, %v2147
  %v2210 = vpack.c.b16 %v2150, %v2148
  %v2211 = vpack.c.b16 %v2153, %v2151
  %v2212 = vpack.c.b16 %v2154, %v2152
  %v2213 = vpack.c.b16 %v2157, %v2155
  %v2214 = vpack.c.b16 %v2158, %v2156
  %v2215 = vpack.c.b16 %v2161, %v2159
  %v2216 = vpack.c.b16 %v2162, %v2160
  %v2217 = vpack.c.b16 %v2165, %v2163
  %v2218 = vpack.c.b16 %v2166, %v2164
  %v2219 = vpack.c.b16 %v2169, %v2167
  %v2220 = vpack.c.b16 %v2170, %v2168
  %v2221 = vpack.c.b16 %v2173, %v2171
  %v2222 = vpack.c.b16 %v2174, %v2172
  %v2223 = vpack.c.b16 %v2177, %v2175
  %v2224 = vpack.c.b16 %v2178, %v2176
  %v2225 = vpack.c.b16 %v2181, %v2179
  %v2226 = vpack.c.b16 %v2182, %v2180
  %v2227 = vpack.c.b16 %v2185, %v2183
  %v2228 = vpack.c.b16 %v2186, %v2184
  %v2229 = vpack.c.b16 %v2189, %v2187
  %v2230 = vpack.c.b16 %v2190, %v2188
  %v2231 = vpack.c.b16 %v2193, %v2191
  %v2232 = vpack.c.b16 %v2194, %v2192
  %v2233 = vpack.c.b16 %v2197, %v2195
  %v2234 = vpack.c.b16 %v2198, %v2196
  %v2235 = vpack.c.b16 %v2201, %v2199
  %v2236 = vpack.c.b16 %v2202, %v2200
  %v2237 = vpack.c.b16 %v2205, %v2203
  %v2238 = vpack.c.b16 %v2206, %v2204
  %2271 = vmatprep.subr.bf16.mxu0 %v2208
  %2272 = vmatpush1.bf16.msra.mxu0 %v2207
  %2273 = vmatprep.subr.bf16.mxu0 %v2210
  %2274 = vmatpush1.bf16.msra.mxu0 %v2209
  %2275 = vmatprep.subr.bf16.mxu0 %v2212
  %2276 = vmatpush1.bf16.msra.mxu0 %v2211
  %2277 = vmatprep.subr.bf16.mxu0 %v2214
  %2278 = vmatpush1.bf16.msra.mxu0 %v2213
  %2279 = vmatprep.subr.bf16.mxu0 %v2216
  %2280 = vmatpush1.bf16.msra.mxu0 %v2215
  %2281 = vmatprep.subr.bf16.mxu0 %v2218
  %2282 = vmatpush1.bf16.msra.mxu0 %v2217
  %2283 = vmatprep.subr.bf16.mxu0 %v2220
  %2284 = vmatpush1.bf16.msra.mxu0 %v2219
  %2285 = vmatprep.subr.bf16.mxu0 %v2222
  %2286 = vmatpush1.bf16.msra.mxu0 %v2221
  %2287 = vmatprep.subr.bf16.mxu0 %v2224
  %2288 = vmatpush1.bf16.msra.mxu0 %v2223
  %2289 = vmatprep.subr.bf16.mxu0 %v2226
  %2290 = vmatpush1.bf16.msra.mxu0 %v2225
  %2291 = vmatprep.subr.bf16.mxu0 %v2228
  %2292 = vmatpush1.bf16.msra.mxu0 %v2227
  %2293 = vmatprep.subr.bf16.mxu0 %v2230
  %2294 = vmatpush1.bf16.msra.mxu0 %v2229
  %2295 = vmatprep.subr.bf16.mxu0 %v2232
  %2296 = vmatpush1.bf16.msra.mxu0 %v2231
  %2297 = vmatprep.subr.bf16.mxu0 %v2234
  %2298 = vmatpush1.bf16.msra.mxu0 %v2233
  %2299 = vmatprep.subr.bf16.mxu0 %v2236
  %2300 = vmatpush1.bf16.msra.mxu0 %v2235
  %2301 = vmatprep.subr.bf16.mxu0 %v2238
  %2302 = vmatpush1.bf16.msra.mxu0 %v2237
  %2303 = vmatprep.mubr.bf16.mxu0 %v158
  %2304 = vmatmul.mubr.bf16.gmra.mrb[0].mxu0 %v157
  %v2305 = vpop.f32.mrb[0].mxu0
  %v2306 = vadd.f32 0.0, %v2305
  %v2307 = vpop.f32.mrb[0].mxu0
  %v2308 = vadd.f32 0.0, %v2307
  %v2309 = vpop.f32.mrb[0].mxu0
  %v2310 = vadd.f32 0.0, %v2309
  %v2311 = vpop.f32.mrb[0].mxu0
  %v2312 = vadd.f32 0.0, %v2311
  %2313 = vmatprep.mubr.bf16.mxu0 %v160
  %2314 = vmatmul.mubr.bf16.gmra.mrb[0].mxu0 %v159
  %v2315 = vpop.f32.mrb[0].mxu0
  %v2316 = vadd.f32 0.0, %v2315
  %v2317 = vpop.f32.mrb[0].mxu0
  %v2318 = vadd.f32 0.0, %v2317
  %v2319 = vpop.f32.mrb[0].mxu0
  %v2320 = vadd.f32 0.0, %v2319
  %v2321 = vpop.f32.mrb[0].mxu0
  %v2322 = vadd.f32 0.0, %v2321
  %2323 = vdwg.mxu0
  %v2324 = vmul.f32 %v149, %v2306
  %v2325 = vmul.f32 %v150, %v2308
  %v2326 = vmul.f32 %v151, %v2310
  %v2327 = vmul.f32 %v152, %v2312
  %v2328 = vmul.f32 %v153, %v2316
  %v2329 = vmul.f32 %v154, %v2318
  %v2330 = vmul.f32 %v155, %v2320
  %v2331 = vmul.f32 %v156, %v2322
  %v2332 = vadd.f32 %v2324, %v2326
  %v2333 = vadd.f32 %v2332, %v2328
  %v2334 = vadd.f32 %v2333, %v2330
  %v2335 = vrot.slane %v2334, 4
  %v2336 = vadd.f32 %v2334, %v2335
  %v2337 = vrot.slane %v2336, 2
  %v2338 = vadd.f32 %v2336, %v2337
  %v2339 = vrot.slane %v2338, 1
  %v2340 = vadd.f32 %v2338, %v2339
  %v2341 = vadd.f32 %v2325, %v2327
  %v2342 = vadd.f32 %v2341, %v2329
  %v2343 = vadd.f32 %v2342, %v2331
  %v2344 = vrot.slane %v2343, 4
  %v2345 = vadd.f32 %v2343, %v2344
  %v2346 = vrot.slane %v2345, 2
  %v2347 = vadd.f32 %v2345, %v2346
  %v2348 = vrot.slane %v2347, 1
  %v2349 = vadd.f32 %v2347, %v2348
  %v2350 = vmul.f32 %v2340, 0.088388346
  %v2351 = vmul.f32 %v2349, 0.088388346
  %v2352 = vmax.f32 %v432, %v706
  %v2353 = vmax.f32 %v433, %v707
  %v2354 = vmax.f32 %v2352, %v980
  %v2355 = vmax.f32 %v2353, %v981
  %v2356 = vmax.f32 %v2354, %v1254
  %v2357 = vmax.f32 %v2355, %v1255
  %v2358 = vmax.f32 %v2356, %v1528
  %v2359 = vmax.f32 %v2357, %v1529
  %v2360 = vmax.f32 %v2358, %v1802
  %v2361 = vmax.f32 %v2359, %v1803
  %v2362 = vmax.f32 %v2360, %v2076
  %v2363 = vmax.f32 %v2361, %v2077
  %v2364 = vmax.f32 %v2362, %v2350
  %v2365 = vmax.f32 %v2363, %v2351
  %v2366 = vsub.f32 %v432, %v2364
  %v2367 = vsub.f32 %v433, %v2365
  %v2368 = vmul.f32 %v2366, 1.442695
  %v2369 = vpow.pop %v2368
  %v2370 = vmul.f32 %v2367, 1.442695
  %v2371 = vpow.pop %v2370
  %v2372 = vadd.f32 %v2369, 0.0
  %v2373 = vadd.f32 %v2371, 0.0
  %v2374 = vmul.f32 %v2369, 0.5
  %v2375 = vmul.f32 %v2371, 0.5
  %v2376 = vadd.f32 %v2374, 0.0
  %v2377 = vadd.f32 %v2375, 0.0
  %v2378 = vsub.f32 %v706, %v2364
  %v2379 = vsub.f32 %v707, %v2365
  %v2380 = vmul.f32 %v2378, 1.442695
  %v2381 = vpow.pop %v2380
  %v2382 = vmul.f32 %v2379, 1.442695
  %v2383 = vpow.pop %v2382
  %v2384 = vadd.f32 %v2372, %v2381
  %v2385 = vadd.f32 %v2373, %v2383
  %v2386 = vmul.f32 %v2381, 1.8571428
  %v2387 = vmul.f32 %v2383, 1.8571428
  %v2388 = vadd.f32 %v2376, %v2386
  %v2389 = vadd.f32 %v2377, %v2387
  %v2390 = vsub.f32 %v980, %v2364
  %v2391 = vsub.f32 %v981, %v2365
  %v2392 = vmul.f32 %v2390, 1.442695
  %v2393 = vpow.pop %v2392
  %v2394 = vmul.f32 %v2391, 1.442695
  %v2395 = vpow.pop %v2394
  %v2396 = vadd.f32 %v2384, %v2393
  %v2397 = vadd.f32 %v2385, %v2395
  %v2398 = vmul.f32 %v2393, 3.2142856
  %v2399 = vmul.f32 %v2395, 3.2142856
  %v2400 = vadd.f32 %v2388, %v2398
  %v2401 = vadd.f32 %v2389, %v2399
  %v2402 = vsub.f32 %v1254, %v2364
  %v2403 = vsub.f32 %v1255, %v2365
  %v2404 = vmul.f32 %v2402, 1.442695
  %v2405 = vpow.pop %v2404
  %v2406 = vmul.f32 %v2403, 1.442695
  %v2407 = vpow.pop %v2406
  %v2408 = vadd.f32 %v2396, %v2405
  %v2409 = vadd.f32 %v2397, %v2407
  %v2410 = vmul.f32 %v2405, 4.571429
  %v2411 = vmul.f32 %v2407, 4.571429
  %v2412 = vadd.f32 %v2400, %v2410
  %v2413 = vadd.f32 %v2401, %v2411
  %v2414 = vsub.f32 %v1528, %v2364
  %v2415 = vsub.f32 %v1529, %v2365
  %v2416 = vmul.f32 %v2414, 1.442695
  %v2417 = vpow.pop %v2416
  %v2418 = vmul.f32 %v2415, 1.442695
  %v2419 = vpow.pop %v2418
  %v2420 = vadd.f32 %v2408, %v2417
  %v2421 = vadd.f32 %v2409, %v2419
  %v2422 = vmul.f32 %v2417, 5.928571
  %v2423 = vmul.f32 %v2419, 5.928571
  %v2424 = vadd.f32 %v2412, %v2422
  %v2425 = vadd.f32 %v2413, %v2423
  %v2426 = vsub.f32 %v1802, %v2364
  %v2427 = vsub.f32 %v1803, %v2365
  %v2428 = vmul.f32 %v2426, 1.442695
  %v2429 = vpow.pop %v2428
  %v2430 = vmul.f32 %v2427, 1.442695
  %v2431 = vpow.pop %v2430
  %v2432 = vadd.f32 %v2420, %v2429
  %v2433 = vadd.f32 %v2421, %v2431
  %v2434 = vmul.f32 %v2429, 7.285714
  %v2435 = vmul.f32 %v2431, 7.285714
  %v2436 = vadd.f32 %v2424, %v2434
  %v2437 = vadd.f32 %v2425, %v2435
  %v2438 = vsub.f32 %v2076, %v2364
  %v2439 = vsub.f32 %v2077, %v2365
  %v2440 = vmul.f32 %v2438, 1.442695
  %v2441 = vpow.pop %v2440
  %v2442 = vmul.f32 %v2439, 1.442695
  %v2443 = vpow.pop %v2442
  %v2444 = vadd.f32 %v2432, %v2441
  %v2445 = vadd.f32 %v2433, %v2443
  %v2446 = vmul.f32 %v2441, 8.642858
  %v2447 = vmul.f32 %v2443, 8.642858
  %v2448 = vadd.f32 %v2436, %v2446
  %v2449 = vadd.f32 %v2437, %v2447
  %v2450 = vsub.f32 %v2350, %v2364
  %v2451 = vsub.f32 %v2351, %v2365
  %v2452 = vmul.f32 %v2450, 1.442695
  %v2453 = vpow.pop %v2452
  %v2454 = vmul.f32 %v2451, 1.442695
  %v2455 = vpow.pop %v2454
  %v2456 = vadd.f32 %v2444, %v2453
  %v2457 = vadd.f32 %v2445, %v2455
  %v2458 = vmul.f32 %v2453, 10.0
  %v2459 = vmul.f32 %v2455, 10.0
  %v2460 = vadd.f32 %v2448, %v2458
  %v2461 = vadd.f32 %v2449, %v2459
  %v2462 = vrcp.pop %v2456
  %v2463 = vrcp.pop %v2457
  %v2464 = vmul.f32 %v2460, %v2462
  %v2465 = vmul.f32 %v2461, %v2463
  %v2468 = vcombine.low %v2464, %v2465
  %v2470 = vunpack.c.l.s4 1966171168
  %v2471 = vunpack.c.0.s8 %v2470
  %v2472 = vlaneseq
  %v2473 = vshrl.u32 %v2472, 7
  %v2474 = vsub.s32 %v2471, %v2473
  %v2475 = vrot.slane %v2468, %v2474
  %v2477 = vunpack.c.l.s4 1966171168
  %v2478 = vunpack.c.0.s8 %v2477
  %v2479 = vlaneseq
  %v2480 = vshrl.u32 %v2479, 7
  %v2481 = vsub.s32 %v2478, %v2480
  %v2482 = vrot.slane %v2475, %v2481
  %v2484 = vlaneseq
  %vm2485 = vcmp.ge.s32.totalorder %v2484, 0
  %vm2486 = vcmp.lt.s32.totalorder %v2484, 256
  %vm2487 = vmand %vm2485, %vm2486
  %2488 = vst.msk [vmem:[%s4] sm:$0x3] %vm2487, %v2482
  // Predicated region
  $region18: #{warp_pose_model_forward.1} parent=0 // pred_check
    _
  $region19: #{warp_pose_model_forward.1} parent=0 // pred_check_branch
    %2490 = sbr.rel (0) target = $region21
  $region20: #{warp_pose_model_forward.1} parent=0 // pred_region
    _
  $region21: #{warp_pose_model_forward.1} parent=0 // pred_fallthru
    _
  // Predicated region
  $region22: #{warp_pose_model_forward.1} parent=0 // pred_check
    _
  $region23: #{warp_pose_model_forward.1} parent=0 // pred_check_branch
    %2492 = sbr.rel (0) target = $region25
  $region24: #{warp_pose_model_forward.1} parent=0 // pred_region
    _
  $region25: #{warp_pose_model_forward.1} parent=0 // pred_fallthru
    _

</llo_original>
